<compile_context>
chip_gen: v7x
topology: tpu7x:2x2x1
jax: 0.10.0
libtpu: 0.0.40
codegen_flags: <defaults>
</compile_context>

<pallas_src>
import functools

import jax
import jax.numpy as jnp
from jax.experimental import pallas as pl
from jax.experimental.pallas import tpu as pltpu

LANE = 128      # lane width (last dim)
SUBLANE = 8     # f32 sublane tile (second-to-last dim)


def _cdiv(a, b):
    return (a + b - 1) // b


def _round_up(x, m):
    return ((x + m - 1) // m) * m


def _decoder_fused_kernel(x_ref, *refs, num_layers):
    """Fused MLP: refs = (w1, b1, ..., wL, bL, out_ref)."""
    o_ref = refs[-1]
    wb = refs[:-1]
    h = x_ref[...]                                   # (tm, K0p) f32
    for i in range(num_layers):
        w = wb[2 * i][...]                           # (Kp, Np) bf16
        b = wb[2 * i + 1][...]                       # (1, Np)  f32
        # bf16 x bf16 on the MXU, f32 accumulate; bias/act in f32 on VPU/EUP.
        y = jnp.dot(h.astype(w.dtype), w,
                    preferred_element_type=jnp.float32) + b
        if i == num_layers - 1:
            # sigmoid(y) == 0.5*(tanh(0.5*y)+1): runs on the EUP slot.
            y = 0.5 * (jnp.tanh(0.5 * y) + 1.0)
        else:
            y = jnp.maximum(y, 0.0)                  # ReLU on VPU
        h = y
    o_ref[...] = h.astype(o_ref.dtype)


def init_decoder_params(key, latent_vector_dim, sub_dim):
    """Deterministic parameter init (Kaiming-uniform-like, as in torch Linear).

    Returns UNPADDED params: list of (w: (in, out), b: (out,)) in f32.
    """
    dims = [sub_dim, latent_vector_dim, 48, 98, 196, 392, 28 * 28]
    params = []
    for i in range(len(dims) - 1):
        fan_in, fan_out = dims[i], dims[i + 1]
        key, kw, kb = jax.random.split(key, 3)
        bound = 1.0 / jnp.sqrt(jnp.float32(fan_in))
        w = jax.random.uniform(kw, (fan_in, fan_out), jnp.float32, -bound, bound)
        b = jax.random.uniform(kb, (fan_out,), jnp.float32, -bound, bound)
        params.append((w, b))
    return params


def pad_params(params, weight_dtype=jnp.bfloat16):
    """Pad the contraction (in) dims to 128 lanes; hidden out dims to 128;
    the LAST layer's out dim is left unpadded (784) so the kernel can write
    the real output block directly.

    Zero rows/cols contribute nothing to the matmul and zero bias keeps
    padded hidden lanes at ReLU(0) = 0, so the real columns are unaffected.
    Weights are cast to bf16 (MXU input dtype); biases stay f32.
    """
    padded = []
    last = len(params) - 1
    for i, (w, b) in enumerate(params):
        k, n = w.shape
        kp = _round_up(k, LANE)
        np_ = n if i == last else _round_up(n, LANE)
        wp = jnp.zeros((kp, np_), weight_dtype).at[:k, :n].set(
            w.astype(weight_dtype))
        bp = jnp.zeros((1, np_), jnp.float32).at[0, :n].set(b)
        padded.append((wp, bp))
    return padded


def decoder_forward(padded_params, x, *, max_m_tile=256,
                    out_dtype=jnp.float32):
    """Fused decoder forward: one pallas_call for the whole MLP.

    x: (batch, sub_dim) f32 (unpadded).  Returns (batch, 784) out_dtype.
    max_m_tile: 256 is safe on every generation; 512 is a good choice on
    v6e/v7x for large batches (total VMEM stays well under their limits).
    """
    batch, in_dim = x.shape
    k0p = padded_params[0][0].shape[0]
    out_dim = padded_params[-1][0].shape[1]          # 784 (unpadded)
    num_layers = len(padded_params)

    # Split the batch into the FEWEST equal, sublane-aligned tiles (caps
    # padding waste at < 1 sublane tile per grid step), and force >= 2
    # parallel grid steps when the batch allows so both v7x TCs get work.
    m_aligned = _round_up(batch, SUBLANE)
    n_tiles = _cdiv(m_aligned, max_m_tile)
    if n_tiles == 1 and m_aligned >= 2 * SUBLANE:
        n_tiles = 2
    tm = _round_up(_cdiv(batch, n_tiles), SUBLANE)
    m_pad = n_tiles * tm

    x_pad = jnp.zeros((m_pad, k0p), jnp.float32).at[:batch, :in_dim].set(x)

    # x / out stream over the batch grid; weights & biases use constant
    # block indices + single buffering, so they are DMA'd once and stay
    # resident in VMEM across grid steps.
    in_specs = [pl.BlockSpec((tm, k0p), lambda i: (i, 0))]
    flat_wb = []
    for w, b in padded_params:
        kp, np_ = w.shape
        in_specs.append(pl.BlockSpec((kp, np_), lambda i: (0, 0),
                                     pipeline_mode=pl.Buffered(1)))
        in_specs.append(pl.BlockSpec((1, np_), lambda i: (0, 0),
                                     pipeline_mode=pl.Buffered(1)))
        flat_wb.extend([w, b])
    out_specs = pl.BlockSpec((tm, out_dim), lambda i: (i, 0))

    kernel = functools.partial(_decoder_fused_kernel, num_layers=num_layers)
    out = pl.pallas_call(
        kernel,
        out_shape=jax.ShapeDtypeStruct((m_pad, out_dim), out_dtype),
        grid=(n_tiles,),
        in_specs=in_specs,
        out_specs=out_specs,
        compiler_params=pltpu.CompilerParams(
            dimension_semantics=("parallel",),
            vmem_limit_bytes=32 * 1024 * 1024),
    )(x_pad, *flat_wb)

    # Only padded ROWS (if any) need slicing; columns are already exact.
    return out if m_pad == batch else out[:batch]


def decoder_forward_ref(params, x):
    """Pure-JAX f32 reference (unpadded) for correctness check."""
    h = x
    for i, (w, b) in enumerate(params):
        h = h @ w + b
        if i == len(params) - 1:
            h = jax.nn.sigmoid(h)
        else:
            h = jnp.maximum(h, 0.0)
    return h


if __name__ == "__main__":
    latent_vector_dim = 32
    sub_dim = 16
    batch = 8

    key = jax.random.PRNGKey(0)
    key, kx = jax.random.split(key)
    x = jax.random.normal(kx, (batch, sub_dim), jnp.float32)

    params = init_decoder_params(key, latent_vector_dim, sub_dim)
    padded_params = pad_params(params)              # bf16 weights, f32 biases

    out = decoder_forward(padded_params, x)
    out = jax.block_until_ready(out)

    ref = decoder_forward_ref(params, x)
    assert out.shape == (batch, 28 * 28), out.shape
    # bf16 weights/activations on the MXU vs. the f32 reference: tolerance
    # reflects the intentional precision trade (outputs are in (0, 1)).
    max_err = float(jnp.max(jnp.abs(out - ref)))
    assert jnp.allclose(out, ref, atol=2e-2, rtol=0.0), max_err

    print("KERNEL_OK")
</pallas_src>

<mosaic_0001>
module attributes {stable_mosaic.version = 11 : i64} {
  func.func @_decoder_fused_kernel(%arg0: i32, %arg1: memref<8x128xf32, #tpu.memory_space<vmem>>, %arg2: memref<128x128xbf16, #tpu.memory_space<vmem>>, %arg3: memref<1x128xf32, #tpu.memory_space<vmem>>, %arg4: memref<128x128xbf16, #tpu.memory_space<vmem>>, %arg5: memref<1x128xf32, #tpu.memory_space<vmem>>, %arg6: memref<128x128xbf16, #tpu.memory_space<vmem>>, %arg7: memref<1x128xf32, #tpu.memory_space<vmem>>, %arg8: memref<128x256xbf16, #tpu.memory_space<vmem>>, %arg9: memref<1x256xf32, #tpu.memory_space<vmem>>, %arg10: memref<256x512xbf16, #tpu.memory_space<vmem>>, %arg11: memref<1x512xf32, #tpu.memory_space<vmem>>, %arg12: memref<512x784xbf16, #tpu.memory_space<vmem>>, %arg13: memref<1x784xf32, #tpu.memory_space<vmem>>, %arg14: memref<8x784xf32, #tpu.memory_space<vmem>>) attributes {dimension_semantics = [#tpu.dimension_semantics<parallel>], iteration_bounds = array<i64: 1>, scalar_prefetch = 0 : i64, scratch_operands = 0 : i64, tpu.core_type = #tpu.core_type<tc>, window_params = [{transform_indices = @transform_0, window_bounds = array<i64: 8, 128>}, {pipeline_mode = #tpu.pipeline_mode<synchronous>, transform_indices = @transform_1, window_bounds = array<i64: 128, 128>}, {pipeline_mode = #tpu.pipeline_mode<synchronous>, transform_indices = @transform_2, window_bounds = array<i64: 1, 128>}, {pipeline_mode = #tpu.pipeline_mode<synchronous>, transform_indices = @transform_3, window_bounds = array<i64: 128, 128>}, {pipeline_mode = #tpu.pipeline_mode<synchronous>, transform_indices = @transform_4, window_bounds = array<i64: 1, 128>}, {pipeline_mode = #tpu.pipeline_mode<synchronous>, transform_indices = @transform_5, window_bounds = array<i64: 128, 128>}, {pipeline_mode = #tpu.pipeline_mode<synchronous>, transform_indices = @transform_6, window_bounds = array<i64: 1, 128>}, {pipeline_mode = #tpu.pipeline_mode<synchronous>, transform_indices = @transform_7, window_bounds = array<i64: 128, 256>}, {pipeline_mode = #tpu.pipeline_mode<synchronous>, transform_indices = @transform_8, window_bounds = array<i64: 1, 256>}, {pipeline_mode = #tpu.pipeline_mode<synchronous>, transform_indices = @transform_9, window_bounds = array<i64: 256, 512>}, {pipeline_mode = #tpu.pipeline_mode<synchronous>, transform_indices = @transform_10, window_bounds = array<i64: 1, 512>}, {pipeline_mode = #tpu.pipeline_mode<synchronous>, transform_indices = @transform_11, window_bounds = array<i64: 512, 784>}, {pipeline_mode = #tpu.pipeline_mode<synchronous>, transform_indices = @transform_12, window_bounds = array<i64: 1, 784>}, {transform_indices = @transform_13, window_bounds = array<i64: 8, 784>}]} {
    %c0 = arith.constant 0 : index
    %c0_0 = arith.constant 0 : index
    %0 = vector.load %arg1[%c0, %c0_0] : memref<8x128xf32, #tpu.memory_space<vmem>>, vector<8x128xf32>
    %c0_1 = arith.constant 0 : index
    %c0_2 = arith.constant 0 : index
    %1 = vector.load %arg2[%c0_1, %c0_2] : memref<128x128xbf16, #tpu.memory_space<vmem>>, vector<128x128xbf16>
    %c0_3 = arith.constant 0 : index
    %c0_4 = arith.constant 0 : index
    %2 = vector.load %arg3[%c0_3, %c0_4] : memref<1x128xf32, #tpu.memory_space<vmem>>, vector<1x128xf32>
    %3 = arith.truncf %0 : vector<8x128xf32> to vector<8x128xbf16>
    %cst = arith.constant dense<0.000000e+00> : vector<8x128xf32>
    %4 = tpu.matmul %3, %1, %cst {dimension_numbers = #tpu.dot_dimension_numbers<[1], [0], [0], [1], [0, 0, 1, 1], [], []>} : vector<8x128xbf16>, vector<128x128xbf16>, vector<8x128xf32> -> vector<8x128xf32>
    %5 = vector.broadcast %2 : vector<1x128xf32> to vector<8x128xf32>
    %6 = arith.addf %4, %5 : vector<8x128xf32>
    %cst_5 = arith.constant 0.000000e+00 : f32
    %7 = vector.broadcast %cst_5 : f32 to vector<8x128xf32>
    %8 = arith.maximumf %6, %7 : vector<8x128xf32>
    %c0_6 = arith.constant 0 : index
    %c0_7 = arith.constant 0 : index
    %9 = vector.load %arg4[%c0_6, %c0_7] : memref<128x128xbf16, #tpu.memory_space<vmem>>, vector<128x128xbf16>
    %c0_8 = arith.constant 0 : index
    %c0_9 = arith.constant 0 : index
    %10 = vector.load %arg5[%c0_8, %c0_9] : memref<1x128xf32, #tpu.memory_space<vmem>>, vector<1x128xf32>
    %11 = arith.truncf %8 : vector<8x128xf32> to vector<8x128xbf16>
    %cst_10 = arith.constant dense<0.000000e+00> : vector<8x128xf32>
    %12 = tpu.matmul %11, %9, %cst_10 {dimension_numbers = #tpu.dot_dimension_numbers<[1], [0], [0], [1], [0, 0, 1, 1], [], []>} : vector<8x128xbf16>, vector<128x128xbf16>, vector<8x128xf32> -> vector<8x128xf32>
    %13 = vector.broadcast %10 : vector<1x128xf32> to vector<8x128xf32>
    %14 = arith.addf %12, %13 : vector<8x128xf32>
    %cst_11 = arith.constant 0.000000e+00 : f32
    %15 = vector.broadcast %cst_11 : f32 to vector<8x128xf32>
    %16 = arith.maximumf %14, %15 : vector<8x128xf32>
    %c0_12 = arith.constant 0 : index
    %c0_13 = arith.constant 0 : index
    %17 = vector.load %arg6[%c0_12, %c0_13] : memref<128x128xbf16, #tpu.memory_space<vmem>>, vector<128x128xbf16>
    %c0_14 = arith.constant 0 : index
    %c0_15 = arith.constant 0 : index
    %18 = vector.load %arg7[%c0_14, %c0_15] : memref<1x128xf32, #tpu.memory_space<vmem>>, vector<1x128xf32>
    %19 = arith.truncf %16 : vector<8x128xf32> to vector<8x128xbf16>
    %cst_16 = arith.constant dense<0.000000e+00> : vector<8x128xf32>
    %20 = tpu.matmul %19, %17, %cst_16 {dimension_numbers = #tpu.dot_dimension_numbers<[1], [0], [0], [1], [0, 0, 1, 1], [], []>} : vector<8x128xbf16>, vector<128x128xbf16>, vector<8x128xf32> -> vector<8x128xf32>
    %21 = vector.broadcast %18 : vector<1x128xf32> to vector<8x128xf32>
    %22 = arith.addf %20, %21 : vector<8x128xf32>
    %cst_17 = arith.constant 0.000000e+00 : f32
    %23 = vector.broadcast %cst_17 : f32 to vector<8x128xf32>
    %24 = arith.maximumf %22, %23 : vector<8x128xf32>
    %c0_18 = arith.constant 0 : index
    %c0_19 = arith.constant 0 : index
    %25 = vector.load %arg8[%c0_18, %c0_19] : memref<128x256xbf16, #tpu.memory_space<vmem>>, vector<128x256xbf16>
    %c0_20 = arith.constant 0 : index
    %c0_21 = arith.constant 0 : index
    %26 = vector.load %arg9[%c0_20, %c0_21] : memref<1x256xf32, #tpu.memory_space<vmem>>, vector<1x256xf32>
    %27 = arith.truncf %24 : vector<8x128xf32> to vector<8x128xbf16>
    %cst_22 = arith.constant dense<0.000000e+00> : vector<8x256xf32>
    %28 = tpu.matmul %27, %25, %cst_22 {dimension_numbers = #tpu.dot_dimension_numbers<[1], [0], [0], [1], [0, 0, 1, 1], [], []>} : vector<8x128xbf16>, vector<128x256xbf16>, vector<8x256xf32> -> vector<8x256xf32>
    %29 = vector.broadcast %26 : vector<1x256xf32> to vector<8x256xf32>
    %30 = arith.addf %28, %29 : vector<8x256xf32>
    %cst_23 = arith.constant 0.000000e+00 : f32
    %31 = vector.broadcast %cst_23 : f32 to vector<8x256xf32>
    %32 = arith.maximumf %30, %31 : vector<8x256xf32>
    %c0_24 = arith.constant 0 : index
    %c0_25 = arith.constant 0 : index
    %33 = vector.load %arg10[%c0_24, %c0_25] : memref<256x512xbf16, #tpu.memory_space<vmem>>, vector<256x512xbf16>
    %c0_26 = arith.constant 0 : index
    %c0_27 = arith.constant 0 : index
    %34 = vector.load %arg11[%c0_26, %c0_27] : memref<1x512xf32, #tpu.memory_space<vmem>>, vector<1x512xf32>
    %35 = arith.truncf %32 : vector<8x256xf32> to vector<8x256xbf16>
    %cst_28 = arith.constant dense<0.000000e+00> : vector<8x512xf32>
    %36 = tpu.matmul %35, %33, %cst_28 {dimension_numbers = #tpu.dot_dimension_numbers<[1], [0], [0], [1], [0, 0, 1, 1], [], []>} : vector<8x256xbf16>, vector<256x512xbf16>, vector<8x512xf32> -> vector<8x512xf32>
    %37 = vector.broadcast %34 : vector<1x512xf32> to vector<8x512xf32>
    %38 = arith.addf %36, %37 : vector<8x512xf32>
    %cst_29 = arith.constant 0.000000e+00 : f32
    %39 = vector.broadcast %cst_29 : f32 to vector<8x512xf32>
    %40 = arith.maximumf %38, %39 : vector<8x512xf32>
    %c0_30 = arith.constant 0 : index
    %c0_31 = arith.constant 0 : index
    %41 = vector.load %arg12[%c0_30, %c0_31] : memref<512x784xbf16, #tpu.memory_space<vmem>>, vector<512x784xbf16>
    %c0_32 = arith.constant 0 : index
    %c0_33 = arith.constant 0 : index
    %42 = vector.load %arg13[%c0_32, %c0_33] : memref<1x784xf32, #tpu.memory_space<vmem>>, vector<1x784xf32>
    %43 = arith.truncf %40 : vector<8x512xf32> to vector<8x512xbf16>
    %cst_34 = arith.constant dense<0.000000e+00> : vector<8x784xf32>
    %44 = tpu.matmul %43, %41, %cst_34 {dimension_numbers = #tpu.dot_dimension_numbers<[1], [0], [0], [1], [0, 0, 1, 1], [], []>} : vector<8x512xbf16>, vector<512x784xbf16>, vector<8x784xf32> -> vector<8x784xf32>
    %45 = vector.broadcast %42 : vector<1x784xf32> to vector<8x784xf32>
    %46 = arith.addf %44, %45 : vector<8x784xf32>
    %cst_35 = arith.constant 5.000000e-01 : f32
    %47 = vector.broadcast %cst_35 : f32 to vector<8x784xf32>
    %48 = arith.mulf %47, %46 : vector<8x784xf32>
    %49 = math.tanh %48 : vector<8x784xf32>
    %cst_36 = arith.constant 1.000000e+00 : f32
    %50 = vector.broadcast %cst_36 : f32 to vector<8x784xf32>
    %51 = arith.addf %49, %50 : vector<8x784xf32>
    %cst_37 = arith.constant 5.000000e-01 : f32
    %52 = vector.broadcast %cst_37 : f32 to vector<8x784xf32>
    %53 = arith.mulf %52, %51 : vector<8x784xf32>
    %c0_38 = arith.constant 0 : index
    %c0_39 = arith.constant 0 : index
    %54 = vector.load %arg14[%c0_38, %c0_39] : memref<8x784xf32, #tpu.memory_space<vmem>>, vector<8x784xf32>
    tpu.vector_store %arg14[%c0_38, %c0_39], %53 {strides = array<i32>} : memref<8x784xf32, #tpu.memory_space<vmem>>, vector<8x784xf32>,
    return
  }
  func.func @transform_0(%arg0: i32) -> (i32, i32) {
    %c0_i32 = arith.constant 0 : i32
    %c0_i32_0 = arith.constant 0 : i32
    return %arg0, %c0_i32 : i32, i32
  }
  func.func @transform_1(%arg0: i32) -> (i32, i32) {
    %c0_i32 = arith.constant 0 : i32
    %c0_i32_0 = arith.constant 0 : i32
    %c0_i32_1 = arith.constant 0 : i32
    return %c0_i32, %c0_i32_0 : i32, i32
  }
  func.func @transform_2(%arg0: i32) -> (i32, i32) {
    %c0_i32 = arith.constant 0 : i32
    %c0_i32_0 = arith.constant 0 : i32
    %c0_i32_1 = arith.constant 0 : i32
    return %c0_i32, %c0_i32_0 : i32, i32
  }
  func.func @transform_3(%arg0: i32) -> (i32, i32) {
    %c0_i32 = arith.constant 0 : i32
    %c0_i32_0 = arith.constant 0 : i32
    %c0_i32_1 = arith.constant 0 : i32
    return %c0_i32, %c0_i32_0 : i32, i32
  }
  func.func @transform_4(%arg0: i32) -> (i32, i32) {
    %c0_i32 = arith.constant 0 : i32
    %c0_i32_0 = arith.constant 0 : i32
    %c0_i32_1 = arith.constant 0 : i32
    return %c0_i32, %c0_i32_0 : i32, i32
  }
  func.func @transform_5(%arg0: i32) -> (i32, i32) {
    %c0_i32 = arith.constant 0 : i32
    %c0_i32_0 = arith.constant 0 : i32
    %c0_i32_1 = arith.constant 0 : i32
    return %c0_i32, %c0_i32_0 : i32, i32
  }
  func.func @transform_6(%arg0: i32) -> (i32, i32) {
    %c0_i32 = arith.constant 0 : i32
    %c0_i32_0 = arith.constant 0 : i32
    %c0_i32_1 = arith.constant 0 : i32
    return %c0_i32, %c0_i32_0 : i32, i32
  }
  func.func @transform_7(%arg0: i32) -> (i32, i32) {
    %c0_i32 = arith.constant 0 : i32
    %c0_i32_0 = arith.constant 0 : i32
    %c0_i32_1 = arith.constant 0 : i32
    return %c0_i32, %c0_i32_0 : i32, i32
  }
  func.func @transform_8(%arg0: i32) -> (i32, i32) {
    %c0_i32 = arith.constant 0 : i32
    %c0_i32_0 = arith.constant 0 : i32
    %c0_i32_1 = arith.constant 0 : i32
    return %c0_i32, %c0_i32_0 : i32, i32
  }
  func.func @transform_9(%arg0: i32) -> (i32, i32) {
    %c0_i32 = arith.constant 0 : i32
    %c0_i32_0 = arith.constant 0 : i32
    %c0_i32_1 = arith.constant 0 : i32
    return %c0_i32, %c0_i32_0 : i32, i32
  }
  func.func @transform_10(%arg0: i32) -> (i32, i32) {
    %c0_i32 = arith.constant 0 : i32
    %c0_i32_0 = arith.constant 0 : i32
    %c0_i32_1 = arith.constant 0 : i32
    return %c0_i32, %c0_i32_0 : i32, i32
  }
  func.func @transform_11(%arg0: i32) -> (i32, i32) {
    %c0_i32 = arith.constant 0 : i32
    %c0_i32_0 = arith.constant 0 : i32
    %c0_i32_1 = arith.constant 0 : i32
    return %c0_i32, %c0_i32_0 : i32, i32
  }
  func.func @transform_12(%arg0: i32) -> (i32, i32) {
    %c0_i32 = arith.constant 0 : i32
    %c0_i32_0 = arith.constant 0 : i32
    %c0_i32_1 = arith.constant 0 : i32
    return %c0_i32, %c0_i32_0 : i32, i32
  }
  func.func @transform_13(%arg0: i32) -> (i32, i32) {
    %c0_i32 = arith.constant 0 : i32
    %c0_i32_0 = arith.constant 0 : i32
    return %arg0, %c0_i32 : i32, i32
  }
}

</mosaic_0001>

<llo_original>
// kernel: tpu_custom_call.1
$region0: #{tpu_custom_call.1}
  #allocation0 [shape = 'u32[]', space=smem, size = 0x4, offset = 0x4, fixed_abs, tag = 'smem constant byte address 0x4 - core index']
  #allocation1 [shape = 'u32[144,128]{1,0:T(1,128)}', space=vmem, size = 0x12000, scoped, tag = 'internal scratch']
  %s0 = inlined_call_operand.vmem [shape: f32[8,128], index: 0, kind: input, shape index: {}]
  %s1 = inlined_call_operand.vmem [shape: bf16[128,128], index: 1, kind: input, shape index: {}]
  %s2 = inlined_call_operand.vmem [shape: f32[1,128], index: 2, kind: input, shape index: {}]
  %s3 = inlined_call_operand.vmem [shape: bf16[128,128], index: 3, kind: input, shape index: {}]
  %s4 = inlined_call_operand.vmem [shape: f32[1,128], index: 4, kind: input, shape index: {}]
  %s5 = inlined_call_operand.vmem [shape: bf16[128,128], index: 5, kind: input, shape index: {}]
  %s6 = inlined_call_operand.vmem [shape: f32[1,128], index: 6, kind: input, shape index: {}]
  %s7 = inlined_call_operand.vmem [shape: bf16[128,256], index: 7, kind: input, shape index: {}]
  %s8 = inlined_call_operand.vmem [shape: f32[1,256], index: 8, kind: input, shape index: {}]
  %s9 = inlined_call_operand.vmem [shape: bf16[256,512], index: 9, kind: input, shape index: {}]
  %s10 = inlined_call_operand.vmem [shape: f32[1,512], index: 10, kind: input, shape index: {}]
  %s11 = inlined_call_operand.vmem [shape: bf16[512,784], index: 11, kind: input, shape index: {}]
  %s12 = inlined_call_operand.vmem [shape: f32[1,784], index: 12, kind: input, shape index: {}]
  %s13 = inlined_call_operand.hbm [shape: f32[8,784], index: 13, kind: output, shape index: {}]
  %s14 = sld [smem:[#allocation0]]
  $region62: #{tpu_custom_call.1} parent=0
    _
  %s16 = ssub.s32 1, %s14
  %s17 = scalar_select 0, %s16, %s14
  $region1: #{tpu_custom_call.1} parent=0
    #allocation2 [shape = 'u8[28672]{0}', space=vmem, size = 0x7000, scoped, tag = 'output window, operand 0, single buffered']
    #allocation3 [shape = 's32[1]{0}', space=sflag, size = 0x4, scoped, tag = 'scoped memory for tpu_custom_call.1']
    %18 = vsyncpa [#allocation3], 0
    // Predicated region
    $region2: #{tpu_custom_call.1} parent=1 // pred_check
      _
    $region3: #{tpu_custom_call.1} parent=1 // pred_check_branch
      %20 = sbr.rel (0) target = $region5
    $region4: #{tpu_custom_call.1} parent=1 // pred_region
      _
    $region5: #{tpu_custom_call.1} parent=1 // pred_fallthru
      _
    // Predicated region
    $region6: #{tpu_custom_call.1} parent=1 // pred_check
      _
    $region7: #{tpu_custom_call.1} parent=1 // pred_check_branch
      %22 = sbr.rel (0) target = $region9
    $region8: #{tpu_custom_call.1} parent=1 // pred_region
      _
    $region9: #{tpu_custom_call.1} parent=1 // pred_fallthru
      _
    // Predicated region
    $region10: #{tpu_custom_call.1} parent=1 // pred_check
      _
    $region11: #{tpu_custom_call.1} parent=1 // pred_check_branch
      %24 = sbr.rel (0) target = $region13
    $region12: #{tpu_custom_call.1} parent=1 // pred_region
      _
    $region13: #{tpu_custom_call.1} parent=1 // pred_fallthru
      _
    // Predicated region
    $region14: #{tpu_custom_call.1} parent=1 // pred_check
      _
    $region15: #{tpu_custom_call.1} parent=1 // pred_check_branch
      %26 = sbr.rel (0) target = $region17
    $region16: #{tpu_custom_call.1} parent=1 // pred_region
      _
    $region17: #{tpu_custom_call.1} parent=1 // pred_fallthru
      _
    // Predicated region
    $region18: #{tpu_custom_call.1} parent=1 // pred_check
      _
    $region19: #{tpu_custom_call.1} parent=1 // pred_check_branch
      %28 = sbr.rel (0) target = $region21
    $region20: #{tpu_custom_call.1} parent=1 // pred_region
      _
    $region21: #{tpu_custom_call.1} parent=1 // pred_fallthru
      _
    // Predicated region
    $region22: #{tpu_custom_call.1} parent=1 // pred_check
      _
    $region23: #{tpu_custom_call.1} parent=1 // pred_check_branch
      %30 = sbr.rel (0) target = $region25
    $region24: #{tpu_custom_call.1} parent=1 // pred_region
      _
    $region25: #{tpu_custom_call.1} parent=1 // pred_fallthru
      _
    // Predicated region
    $region26: #{tpu_custom_call.1} parent=1 // pred_check
      _
    $region27: #{tpu_custom_call.1} parent=1 // pred_check_branch
      %32 = sbr.rel (0) target = $region29
    $region28: #{tpu_custom_call.1} parent=1 // pred_region
      _
    $region29: #{tpu_custom_call.1} parent=1 // pred_fallthru
      _
    // Predicated region
    $region30: #{tpu_custom_call.1} parent=1 // pred_check
      _
    $region31: #{tpu_custom_call.1} parent=1 // pred_check_branch
      %34 = sbr.rel (0) target = $region33
    $region32: #{tpu_custom_call.1} parent=1 // pred_region
      _
    $region33: #{tpu_custom_call.1} parent=1 // pred_fallthru
      _
    // Predicated region
    $region34: #{tpu_custom_call.1} parent=1 // pred_check
      _
    $region35: #{tpu_custom_call.1} parent=1 // pred_check_branch
      %36 = sbr.rel (0) target = $region37
    $region36: #{tpu_custom_call.1} parent=1 // pred_region
      _
    $region37: #{tpu_custom_call.1} parent=1 // pred_fallthru
      _
    // Predicated region
    $region38: #{tpu_custom_call.1} parent=1 // pred_check
      _
    $region39: #{tpu_custom_call.1} parent=1 // pred_check_branch
      %38 = sbr.rel (0) target = $region41
    $region40: #{tpu_custom_call.1} parent=1 // pred_region
      _
    $region41: #{tpu_custom_call.1} parent=1 // pred_fallthru
      _
    // Predicated region
    $region42: #{tpu_custom_call.1} parent=1 // pred_check
      _
    $region43: #{tpu_custom_call.1} parent=1 // pred_check_branch
      %40 = sbr.rel (0) target = $region45
    $region44: #{tpu_custom_call.1} parent=1 // pred_region
      _
    $region45: #{tpu_custom_call.1} parent=1 // pred_fallthru
      _
    // Predicated region
    $region46: #{tpu_custom_call.1} parent=1 // pred_check
      _
    $region47: #{tpu_custom_call.1} parent=1 // pred_check_branch
      %42 = sbr.rel (0) target = $region49
    $region48: #{tpu_custom_call.1} parent=1 // pred_region
      _
    $region49: #{tpu_custom_call.1} parent=1 // pred_fallthru
      _
    // Predicated region
    $region50: #{tpu_custom_call.1} parent=1 // pred_check
      _
    $region51: #{tpu_custom_call.1} parent=1 // pred_check_branch
      %44 = sbr.rel (0) target = $region53
    $region52: #{tpu_custom_call.1} parent=1 // pred_region
      _
    $region53: #{tpu_custom_call.1} parent=1 // pred_fallthru
      _
    %v46 = vld [vmem:[%s0] sm:$0xff]
    %v47 = vld [vmem:[%s1] sm:$0xf]
    %v48 = vld [vmem:[%s1 + $0x4] sm:$0xf]
    %v49 = vld [vmem:[%s1 + $0x8] sm:$0xf]
    %v50 = vld [vmem:[%s1 + $0xc] sm:$0xf]
    %v51 = vld [vmem:[%s1 + $0x10] sm:$0xf]
    %v52 = vld [vmem:[%s1 + $0x14] sm:$0xf]
    %v53 = vld [vmem:[%s1 + $0x18] sm:$0xf]
    %v54 = vld [vmem:[%s1 + $0x1c] sm:$0xf]
    %v55 = vld [vmem:[%s1 + $0x20] sm:$0xf]
    %v56 = vld [vmem:[%s1 + $0x24] sm:$0xf]
    %v57 = vld [vmem:[%s1 + $0x28] sm:$0xf]
    %v58 = vld [vmem:[%s1 + $0x2c] sm:$0xf]
    %v59 = vld [vmem:[%s1 + $0x30] sm:$0xf]
    %v60 = vld [vmem:[%s1 + $0x34] sm:$0xf]
    %v61 = vld [vmem:[%s1 + $0x38] sm:$0xf]
    %v62 = vld [vmem:[%s1 + $0x3c] sm:$0xf]
    %v63 = vld [vmem:[%s2] sm:$0x1]
    %v64 = vpack.c.bf16 %v46, %v46
    %v66 = vlaneseq
    %v67 = vshrl.u32 %v66, 7
    %v68 = vsub.s32 0, %v67
    %v69 = vrot.slane %v63, %v68
    %v87 = vunpack.c.l.b16 %v47
    %v88 = vunpack.c.l.b16 %v48
    %v89 = vunpack.c.l.b16 %v49
    %v90 = vunpack.c.l.b16 %v50
    %v91 = vunpack.c.l.b16 %v51
    %v92 = vunpack.c.l.b16 %v52
    %v93 = vunpack.c.l.b16 %v53
    %v94 = vunpack.c.l.b16 %v54
    %v95 = vunpack.c.l.b16 %v55
    %v96 = vunpack.c.l.b16 %v56
    %v97 = vunpack.c.l.b16 %v57
    %v98 = vunpack.c.l.b16 %v58
    %v99 = vunpack.c.l.b16 %v59
    %v100 = vunpack.c.l.b16 %v60
    %v101 = vunpack.c.l.b16 %v61
    %v102 = vunpack.c.l.b16 %v62
    %v103 = vpack.c.b16 %v88, %v87
    %v104 = vpack.c.b16 %v90, %v89
    %v105 = vpack.c.b16 %v92, %v91
    %v106 = vpack.c.b16 %v94, %v93
    %v107 = vpack.c.b16 %v96, %v95
    %v108 = vpack.c.b16 %v98, %v97
    %v109 = vpack.c.b16 %v100, %v99
    %v110 = vpack.c.b16 %v102, %v101
    %119 = vmatprep.subr.bf16.mxu0 0
    %120 = vmatpush1.bf16.msra.mxu0 %v103
    %121 = vmatprep.subr.bf16.mxu0 0
    %122 = vmatpush1.bf16.msra.mxu0 %v104
    %123 = vmatprep.subr.bf16.mxu0 0
    %124 = vmatpush1.bf16.msra.mxu0 %v105
    %125 = vmatprep.subr.bf16.mxu0 0
    %126 = vmatpush1.bf16.msra.mxu0 %v106
    %127 = vmatprep.subr.bf16.mxu0 0
    %128 = vmatpush1.bf16.msra.mxu0 %v107
    %129 = vmatprep.subr.bf16.mxu0 0
    %130 = vmatpush1.bf16.msra.mxu0 %v108
    %131 = vmatprep.subr.bf16.mxu0 0
    %132 = vmatpush1.bf16.msra.mxu0 %v109
    %133 = vmatprep.subr.bf16.mxu0 0
    %134 = vmatpush1.bf16.msra.mxu0 %v110
    %135 = vmatprep.subr.bf16.mxu0 0
    %136 = vmatpush1.bf16.msra.mxu0 0
    %137 = vmatprep.subr.bf16.mxu0 0
    %138 = vmatpush1.bf16.msra.mxu0 0
    %139 = vmatprep.subr.bf16.mxu0 0
    %140 = vmatpush1.bf16.msra.mxu0 0
    %141 = vmatprep.subr.bf16.mxu0 0
    %142 = vmatpush1.bf16.msra.mxu0 0
    %143 = vmatprep.subr.bf16.mxu0 0
    %144 = vmatpush1.bf16.msra.mxu0 0
    %145 = vmatprep.subr.bf16.mxu0 0
    %146 = vmatpush1.bf16.msra.mxu0 0
    %147 = vmatprep.subr.bf16.mxu0 0
    %148 = vmatpush1.bf16.msra.mxu0 0
    %149 = vmatprep.subr.bf16.mxu0 0
    %150 = vmatpush1.bf16.msra.mxu0 0
    %151 = vmatprep.mubr.bf16.mxu0 0
    %152 = vmatmul.mubr.bf16.gmra.mrb[0].mxu0 %v64
    %v153 = vpop.f32.mrb[0].mxu0
    %v154 = vadd.f32 %v69, %v153
    %v155 = vpop.f32.mrb[0].mxu0
    %v156 = vpop.f32.mrb[0].mxu0
    %v157 = vpop.f32.mrb[0].mxu0
    %158 = vdwg.mxu0
    %v159 = vmax.f32 %v154, 0.0
    %v160 = vld [vmem:[%s3] sm:$0xf]
    %v161 = vld [vmem:[%s3 + $0x4] sm:$0xf]
    %v162 = vld [vmem:[%s3 + $0x8] sm:$0xf]
    %v163 = vld [vmem:[%s3 + $0xc] sm:$0xf]
    %v164 = vld [vmem:[%s3 + $0x10] sm:$0xf]
    %v165 = vld [vmem:[%s3 + $0x14] sm:$0xf]
    %v166 = vld [vmem:[%s3 + $0x18] sm:$0xf]
    %v167 = vld [vmem:[%s3 + $0x1c] sm:$0xf]
    %v168 = vld [vmem:[%s3 + $0x20] sm:$0xf]
    %v169 = vld [vmem:[%s3 + $0x24] sm:$0xf]
    %v170 = vld [vmem:[%s3 + $0x28] sm:$0xf]
    %v171 = vld [vmem:[%s3 + $0x2c] sm:$0xf]
    %v172 = vld [vmem:[%s3 + $0x30] sm:$0xf]
    %v173 = vld [vmem:[%s3 + $0x34] sm:$0xf]
    %v174 = vld [vmem:[%s3 + $0x38] sm:$0xf]
    %v175 = vld [vmem:[%s3 + $0x3c] sm:$0xf]
    %v176 = vld [vmem:[%s4] sm:$0x1]
    %v177 = vpack.c.bf16 %v159, %v159
    %v179 = vlaneseq
    %v180 = vshrl.u32 %v179, 7
    %v181 = vsub.s32 0, %v180
    %v182 = vrot.slane %v176, %v181
    %v200 = vunpack.c.l.b16 %v160
    %v201 = vunpack.c.l.b16 %v161
    %v202 = vunpack.c.l.b16 %v162
    %v203 = vunpack.c.l.b16 %v163
    %v204 = vunpack.c.l.b16 %v164
    %v205 = vunpack.c.l.b16 %v165
    %v206 = vunpack.c.l.b16 %v166
    %v207 = vunpack.c.l.b16 %v167
    %v208 = vunpack.c.l.b16 %v168
    %v209 = vunpack.c.l.b16 %v169
    %v210 = vunpack.c.l.b16 %v170
    %v211 = vunpack.c.l.b16 %v171
    %v212 = vunpack.c.l.b16 %v172
    %v213 = vunpack.c.l.b16 %v173
    %v214 = vunpack.c.l.b16 %v174
    %v215 = vunpack.c.l.b16 %v175
    %v216 = vpack.c.b16 %v201, %v200
    %v217 = vpack.c.b16 %v203, %v202
    %v218 = vpack.c.b16 %v205, %v204
    %v219 = vpack.c.b16 %v207, %v206
    %v220 = vpack.c.b16 %v209, %v208
    %v221 = vpack.c.b16 %v211, %v210
    %v222 = vpack.c.b16 %v213, %v212
    %v223 = vpack.c.b16 %v215, %v214
    %232 = vmatprep.subr.bf16.mxu0 0
    %233 = vmatpush1.bf16.msra.mxu0 %v216
    %234 = vmatprep.subr.bf16.mxu0 0
    %235 = vmatpush1.bf16.msra.mxu0 %v217
    %236 = vmatprep.subr.bf16.mxu0 0
    %237 = vmatpush1.bf16.msra.mxu0 %v218
    %238 = vmatprep.subr.bf16.mxu0 0
    %239 = vmatpush1.bf16.msra.mxu0 %v219
    %240 = vmatprep.subr.bf16.mxu0 0
    %241 = vmatpush1.bf16.msra.mxu0 %v220
    %242 = vmatprep.subr.bf16.mxu0 0
    %243 = vmatpush1.bf16.msra.mxu0 %v221
    %244 = vmatprep.subr.bf16.mxu0 0
    %245 = vmatpush1.bf16.msra.mxu0 %v222
    %246 = vmatprep.subr.bf16.mxu0 0
    %247 = vmatpush1.bf16.msra.mxu0 %v223
    %248 = vmatprep.subr.bf16.mxu0 0
    %249 = vmatpush1.bf16.msra.mxu0 0
    %250 = vmatprep.subr.bf16.mxu0 0
    %251 = vmatpush1.bf16.msra.mxu0 0
    %252 = vmatprep.subr.bf16.mxu0 0
    %253 = vmatpush1.bf16.msra.mxu0 0
    %254 = vmatprep.subr.bf16.mxu0 0
    %255 = vmatpush1.bf16.msra.mxu0 0
    %256 = vmatprep.subr.bf16.mxu0 0
    %257 = vmatpush1.bf16.msra.mxu0 0
    %258 = vmatprep.subr.bf16.mxu0 0
    %259 = vmatpush1.bf16.msra.mxu0 0
    %260 = vmatprep.subr.bf16.mxu0 0
    %261 = vmatpush1.bf16.msra.mxu0 0
    %262 = vmatprep.subr.bf16.mxu0 0
    %263 = vmatpush1.bf16.msra.mxu0 0
    %264 = vmatprep.mubr.bf16.mxu0 0
    %265 = vmatmul.mubr.bf16.gmra.mrb[0].mxu0 %v177
    %v266 = vpop.f32.mrb[0].mxu0
    %v267 = vadd.f32 %v182, %v266
    %v268 = vpop.f32.mrb[0].mxu0
    %v269 = vpop.f32.mrb[0].mxu0
    %v270 = vpop.f32.mrb[0].mxu0
    %271 = vdwg.mxu0
    %v272 = vmax.f32 %v267, 0.0
    %v273 = vld [vmem:[%s5] sm:$0xf]
    %v274 = vld [vmem:[%s5 + $0x4] sm:$0xf]
    %v275 = vld [vmem:[%s5 + $0x8] sm:$0xf]
    %v276 = vld [vmem:[%s5 + $0xc] sm:$0xf]
    %v277 = vld [vmem:[%s5 + $0x10] sm:$0xf]
    %v278 = vld [vmem:[%s5 + $0x14] sm:$0xf]
    %v279 = vld [vmem:[%s5 + $0x18] sm:$0xf]
    %v280 = vld [vmem:[%s5 + $0x1c] sm:$0xf]
    %v281 = vld [vmem:[%s5 + $0x20] sm:$0xf]
    %v282 = vld [vmem:[%s5 + $0x24] sm:$0xf]
    %v283 = vld [vmem:[%s5 + $0x28] sm:$0xf]
    %v284 = vld [vmem:[%s5 + $0x2c] sm:$0xf]
    %v285 = vld [vmem:[%s5 + $0x30] sm:$0xf]
    %v286 = vld [vmem:[%s5 + $0x34] sm:$0xf]
    %v287 = vld [vmem:[%s5 + $0x38] sm:$0xf]
    %v288 = vld [vmem:[%s5 + $0x3c] sm:$0xf]
    %v289 = vld [vmem:[%s6] sm:$0x1]
    %v290 = vpack.c.bf16 %v272, %v272
    %v292 = vlaneseq
    %v293 = vshrl.u32 %v292, 7
    %v294 = vsub.s32 0, %v293
    %v295 = vrot.slane %v289, %v294
    %v313 = vunpack.c.l.b16 %v273
    %v314 = vunpack.c.l.b16 %v274
    %v315 = vunpack.c.l.b16 %v275
    %v316 = vunpack.c.l.b16 %v276
    %v317 = vunpack.c.l.b16 %v277
    %v318 = vunpack.c.l.b16 %v278
    %v319 = vunpack.c.l.b16 %v279
    %v320 = vunpack.c.l.b16 %v280
    %v321 = vunpack.c.l.b16 %v281
    %v322 = vunpack.c.l.b16 %v282
    %v323 = vunpack.c.l.b16 %v283
    %v324 = vunpack.c.l.b16 %v284
    %v325 = vunpack.c.l.b16 %v285
    %v326 = vunpack.c.l.b16 %v286
    %v327 = vunpack.c.l.b16 %v287
    %v328 = vunpack.c.l.b16 %v288
    %v329 = vpack.c.b16 %v314, %v313
    %v330 = vpack.c.b16 %v316, %v315
    %v331 = vpack.c.b16 %v318, %v317
    %v332 = vpack.c.b16 %v320, %v319
    %v333 = vpack.c.b16 %v322, %v321
    %v334 = vpack.c.b16 %v324, %v323
    %v335 = vpack.c.b16 %v326, %v325
    %v336 = vpack.c.b16 %v328, %v327
    %345 = vmatprep.subr.bf16.mxu0 0
    %346 = vmatpush1.bf16.msra.mxu0 %v329
    %347 = vmatprep.subr.bf16.mxu0 0
    %348 = vmatpush1.bf16.msra.mxu0 %v330
    %349 = vmatprep.subr.bf16.mxu0 0
    %350 = vmatpush1.bf16.msra.mxu0 %v331
    %351 = vmatprep.subr.bf16.mxu0 0
    %352 = vmatpush1.bf16.msra.mxu0 %v332
    %353 = vmatprep.subr.bf16.mxu0 0
    %354 = vmatpush1.bf16.msra.mxu0 %v333
    %355 = vmatprep.subr.bf16.mxu0 0
    %356 = vmatpush1.bf16.msra.mxu0 %v334
    %357 = vmatprep.subr.bf16.mxu0 0
    %358 = vmatpush1.bf16.msra.mxu0 %v335
    %359 = vmatprep.subr.bf16.mxu0 0
    %360 = vmatpush1.bf16.msra.mxu0 %v336
    %361 = vmatprep.subr.bf16.mxu0 0
    %362 = vmatpush1.bf16.msra.mxu0 0
    %363 = vmatprep.subr.bf16.mxu0 0
    %364 = vmatpush1.bf16.msra.mxu0 0
    %365 = vmatprep.subr.bf16.mxu0 0
    %366 = vmatpush1.bf16.msra.mxu0 0
    %367 = vmatprep.subr.bf16.mxu0 0
    %368 = vmatpush1.bf16.msra.mxu0 0
    %369 = vmatprep.subr.bf16.mxu0 0
    %370 = vmatpush1.bf16.msra.mxu0 0
    %371 = vmatprep.subr.bf16.mxu0 0
    %372 = vmatpush1.bf16.msra.mxu0 0
    %373 = vmatprep.subr.bf16.mxu0 0
    %374 = vmatpush1.bf16.msra.mxu0 0
    %375 = vmatprep.subr.bf16.mxu0 0
    %376 = vmatpush1.bf16.msra.mxu0 0
    %377 = vmatprep.mubr.bf16.mxu0 0
    %378 = vmatmul.mubr.bf16.gmra.mrb[0].mxu0 %v290
    %v379 = vpop.f32.mrb[0].mxu0
    %v380 = vadd.f32 %v295, %v379
    %v381 = vpop.f32.mrb[0].mxu0
    %v382 = vpop.f32.mrb[0].mxu0
    %v383 = vpop.f32.mrb[0].mxu0
    %384 = vdwg.mxu0
    %v385 = vmax.f32 %v380, 0.0
    %v386 = vld [vmem:[%s7] sm:$0xff]
    %v387 = vld [vmem:[%s7 + $0x8] sm:$0xff]
    %v388 = vld [vmem:[%s7 + $0x10] sm:$0xff]
    %v389 = vld [vmem:[%s7 + $0x18] sm:$0xff]
    %v390 = vld [vmem:[%s7 + $0x20] sm:$0xff]
    %v391 = vld [vmem:[%s7 + $0x28] sm:$0xff]
    %v392 = vld [vmem:[%s7 + $0x30] sm:$0xff]
    %v393 = vld [vmem:[%s7 + $0x38] sm:$0xff]
    %v394 = vld [vmem:[%s7 + $0x40] sm:$0xff]
    %v395 = vld [vmem:[%s7 + $0x48] sm:$0xff]
    %v396 = vld [vmem:[%s7 + $0x50] sm:$0xff]
    %v397 = vld [vmem:[%s7 + $0x58] sm:$0xff]
    %v398 = vld [vmem:[%s7 + $0x60] sm:$0xff]
    %v399 = vld [vmem:[%s7 + $0x68] sm:$0xff]
    %v400 = vld [vmem:[%s7 + $0x70] sm:$0xff]
    %v401 = vld [vmem:[%s7 + $0x78] sm:$0xff]
    %v402 = vld [vmem:[%s8] sm:$0x3]
    %v403 = vpack.c.bf16 %v385, %v385
    %v405 = vlaneseq
    %v406 = vshrl.u32 %v405, 7
    %v407 = vsub.s32 0, %v406
    %v408 = vrot.slane %v402, %v407
    %v409 = vlaneseq
    %v410 = vshrl.u32 %v409, 7
    %v411 = vsub.s32 1, %v410
    %v412 = vrot.slane %v402, %v411
    %v431 = vunpack.c.l.b16 %v386
    %v432 = vunpack.c.h.b16 %v386
    %v433 = vunpack.c.l.b16 %v387
    %v434 = vunpack.c.h.b16 %v387
    %v435 = vunpack.c.l.b16 %v388
    %v436 = vunpack.c.h.b16 %v388
    %v437 = vunpack.c.l.b16 %v389
    %v438 = vunpack.c.h.b16 %v389
    %v439 = vunpack.c.l.b16 %v390
    %v440 = vunpack.c.h.b16 %v390
    %v441 = vunpack.c.l.b16 %v391
    %v442 = vunpack.c.h.b16 %v391
    %v443 = vunpack.c.l.b16 %v392
    %v444 = vunpack.c.h.b16 %v392
    %v445 = vunpack.c.l.b16 %v393
    %v446 = vunpack.c.h.b16 %v393
    %v447 = vunpack.c.l.b16 %v394
    %v448 = vunpack.c.h.b16 %v394
    %v449 = vunpack.c.l.b16 %v395
    %v450 = vunpack.c.h.b16 %v395
    %v451 = vunpack.c.l.b16 %v396
    %v452 = vunpack.c.h.b16 %v396
    %v453 = vunpack.c.l.b16 %v397
    %v454 = vunpack.c.h.b16 %v397
    %v455 = vunpack.c.l.b16 %v398
    %v456 = vunpack.c.h.b16 %v398
    %v457 = vunpack.c.l.b16 %v399
    %v458 = vunpack.c.h.b16 %v399
    %v459 = vunpack.c.l.b16 %v400
    %v460 = vunpack.c.h.b16 %v400
    %v461 = vunpack.c.l.b16 %v401
    %v462 = vunpack.c.h.b16 %v401
    %v463 = vpack.c.b16 %v433, %v431
    %v464 = vpack.c.b16 %v434, %v432
    %v465 = vpack.c.b16 %v437, %v435
    %v466 = vpack.c.b16 %v438, %v436
    %v467 = vpack.c.b16 %v441, %v439
    %v468 = vpack.c.b16 %v442, %v440
    %v469 = vpack.c.b16 %v445, %v443
    %v470 = vpack.c.b16 %v446, %v444
    %v471 = vpack.c.b16 %v449, %v447
    %v472 = vpack.c.b16 %v450, %v448
    %v473 = vpack.c.b16 %v453, %v451
    %v474 = vpack.c.b16 %v454, %v452
    %v475 = vpack.c.b16 %v457, %v455
    %v476 = vpack.c.b16 %v458, %v456
    %v477 = vpack.c.b16 %v461, %v459
    %v478 = vpack.c.b16 %v462, %v460
    %495 = vmatprep.subr.bf16.mxu0 %v464
    %496 = vmatpush1.bf16.msra.mxu0 %v463
    %497 = vmatprep.subr.bf16.mxu0 %v466
    %498 = vmatpush1.bf16.msra.mxu0 %v465
    %499 = vmatprep.subr.bf16.mxu0 %v468
    %500 = vmatpush1.bf16.msra.mxu0 %v467
    %501 = vmatprep.subr.bf16.mxu0 %v470
    %502 = vmatpush1.bf16.msra.mxu0 %v469
    %503 = vmatprep.subr.bf16.mxu0 %v472
    %504 = vmatpush1.bf16.msra.mxu0 %v471
    %505 = vmatprep.subr.bf16.mxu0 %v474
    %506 = vmatpush1.bf16.msra.mxu0 %v473
    %507 = vmatprep.subr.bf16.mxu0 %v476
    %508 = vmatpush1.bf16.msra.mxu0 %v475
    %509 = vmatprep.subr.bf16.mxu0 %v478
    %510 = vmatpush1.bf16.msra.mxu0 %v477
    %511 = vmatprep.subr.bf16.mxu0 0
    %512 = vmatpush1.bf16.msra.mxu0 0
    %513 = vmatprep.subr.bf16.mxu0 0
    %514 = vmatpush1.bf16.msra.mxu0 0
    %515 = vmatprep.subr.bf16.mxu0 0
    %516 = vmatpush1.bf16.msra.mxu0 0
    %517 = vmatprep.subr.bf16.mxu0 0
    %518 = vmatpush1.bf16.msra.mxu0 0
    %519 = vmatprep.subr.bf16.mxu0 0
    %520 = vmatpush1.bf16.msra.mxu0 0
    %521 = vmatprep.subr.bf16.mxu0 0
    %522 = vmatpush1.bf16.msra.mxu0 0
    %523 = vmatprep.subr.bf16.mxu0 0
    %524 = vmatpush1.bf16.msra.mxu0 0
    %525 = vmatprep.subr.bf16.mxu0 0
    %526 = vmatpush1.bf16.msra.mxu0 0
    %527 = vmatprep.mubr.bf16.mxu0 0
    %528 = vmatmul.mubr.bf16.gmra.mrb[0].mxu0 %v403
    %v529 = vpop.f32.mrb[0].mxu0
    %v530 = vadd.f32 %v408, %v529
    %v531 = vpop.f32.mrb[0].mxu0
    %v532 = vadd.f32 %v412, %v531
    %v533 = vpop.f32.mrb[0].mxu0
    %v534 = vpop.f32.mrb[0].mxu0
    %535 = vdwg.mxu0
    %v536 = vmax.f32 %v530, 0.0
    %v537 = vmax.f32 %v532, 0.0
    %v538 = vld [vmem:[%s9] sm:$0xff]
    %v539 = vld [vmem:[%s9 + $0x8] sm:$0xff]
    %v540 = vld [vmem:[%s9 + $0x10] sm:$0xff]
    %v541 = vld [vmem:[%s9 + $0x18] sm:$0xff]
    %v542 = vld [vmem:[%s9 + $0x20] sm:$0xff]
    %v543 = vld [vmem:[%s9 + $0x28] sm:$0xff]
    %v544 = vld [vmem:[%s9 + $0x30] sm:$0xff]
    %v545 = vld [vmem:[%s9 + $0x38] sm:$0xff]
    %v546 = vld [vmem:[%s9 + $0x40] sm:$0xff]
    %v547 = vld [vmem:[%s9 + $0x48] sm:$0xff]
    %v548 = vld [vmem:[%s9 + $0x50] sm:$0xff]
    %v549 = vld [vmem:[%s9 + $0x58] sm:$0xff]
    %v550 = vld [vmem:[%s9 + $0x60] sm:$0xff]
    %v551 = vld [vmem:[%s9 + $0x68] sm:$0xff]
    %v552 = vld [vmem:[%s9 + $0x70] sm:$0xff]
    %v553 = vld [vmem:[%s9 + $0x78] sm:$0xff]
    %v554 = vld [vmem:[%s9 + $0x80] sm:$0xff]
    %v555 = vld [vmem:[%s9 + $0x88] sm:$0xff]
    %v556 = vld [vmem:[%s9 + $0x90] sm:$0xff]
    %v557 = vld [vmem:[%s9 + $0x98] sm:$0xff]
    %v558 = vld [vmem:[%s9 + $0xa0] sm:$0xff]
    %v559 = vld [vmem:[%s9 + $0xa8] sm:$0xff]
    %v560 = vld [vmem:[%s9 + $0xb0] sm:$0xff]
    %v561 = vld [vmem:[%s9 + $0xb8] sm:$0xff]
    %v562 = vld [vmem:[%s9 + $0xc0] sm:$0xff]
    %v563 = vld [vmem:[%s9 + $0xc8] sm:$0xff]
    %v564 = vld [vmem:[%s9 + $0xd0] sm:$0xff]
    %v565 = vld [vmem:[%s9 + $0xd8] sm:$0xff]
    %v566 = vld [vmem:[%s9 + $0xe0] sm:$0xff]
    %v567 = vld [vmem:[%s9 + $0xe8] sm:$0xff]
    %v568 = vld [vmem:[%s9 + $0xf0] sm:$0xff]
    %v569 = vld [vmem:[%s9 + $0xf8] sm:$0xff]
    %v570 = vld [vmem:[%s9 + $0x100] sm:$0xff]
    %v571 = vld [vmem:[%s9 + $0x108] sm:$0xff]
    %v572 = vld [vmem:[%s9 + $0x110] sm:$0xff]
    %v573 = vld [vmem:[%s9 + $0x118] sm:$0xff]
    %v574 = vld [vmem:[%s9 + $0x120] sm:$0xff]
    %v575 = vld [vmem:[%s9 + $0x128] sm:$0xff]
    %v576 = vld [vmem:[%s9 + $0x130] sm:$0xff]
    %v577 = vld [vmem:[%s9 + $0x138] sm:$0xff]
    %v578 = vld [vmem:[%s9 + $0x140] sm:$0xff]
    %v579 = vld [vmem:[%s9 + $0x148] sm:$0xff]
    %v580 = vld [vmem:[%s9 + $0x150] sm:$0xff]
    %v581 = vld [vmem:[%s9 + $0x158] sm:$0xff]
    %v582 = vld [vmem:[%s9 + $0x160] sm:$0xff]
    %v583 = vld [vmem:[%s9 + $0x168] sm:$0xff]
    %v584 = vld [vmem:[%s9 + $0x170] sm:$0xff]
    %v585 = vld [vmem:[%s9 + $0x178] sm:$0xff]
    %v586 = vld [vmem:[%s9 + $0x180] sm:$0xff]
    %v587 = vld [vmem:[%s9 + $0x188] sm:$0xff]
    %v588 = vld [vmem:[%s9 + $0x190] sm:$0xff]
    %v589 = vld [vmem:[%s9 + $0x198] sm:$0xff]
    %v590 = vld [vmem:[%s9 + $0x1a0] sm:$0xff]
    %v591 = vld [vmem:[%s9 + $0x1a8] sm:$0xff]
    %v592 = vld [vmem:[%s9 + $0x1b0] sm:$0xff]
    %v593 = vld [vmem:[%s9 + $0x1b8] sm:$0xff]
    %v594 = vld [vmem:[%s9 + $0x1c0] sm:$0xff]
    %v595 = vld [vmem:[%s9 + $0x1c8] sm:$0xff]
    %v596 = vld [vmem:[%s9 + $0x1d0] sm:$0xff]
    %v597 = vld [vmem:[%s9 + $0x1d8] sm:$0xff]
    %v598 = vld [vmem:[%s9 + $0x1e0] sm:$0xff]
    %v599 = vld [vmem:[%s9 + $0x1e8] sm:$0xff]
    %v600 = vld [vmem:[%s9 + $0x1f0] sm:$0xff]
    %v601 = vld [vmem:[%s9 + $0x1f8] sm:$0xff]
    %v602 = vld [vmem:[%s10] sm:$0xf]
    %v603 = vpack.c.bf16 %v536, %v536
    %v604 = vpack.c.bf16 %v537, %v537
    %v606 = vlaneseq
    %v607 = vshrl.u32 %v606, 7
    %v608 = vsub.s32 0, %v607
    %v609 = vrot.slane %v602, %v608
    %v610 = vlaneseq
    %v611 = vshrl.u32 %v610, 7
    %v612 = vsub.s32 1, %v611
    %v613 = vrot.slane %v602, %v612
    %v614 = vlaneseq
    %v615 = vshrl.u32 %v614, 7
    %v616 = vsub.s32 2, %v615
    %v617 = vrot.slane %v602, %v616
    %v618 = vlaneseq
    %v619 = vshrl.u32 %v618, 7
    %v620 = vsub.s32 3, %v619
    %v621 = vrot.slane %v602, %v620
    %v690 = vunpack.c.l.b16 %v538
    %v691 = vunpack.c.h.b16 %v538
    %v692 = vunpack.c.l.b16 %v539
    %v693 = vunpack.c.h.b16 %v539
    %v694 = vunpack.c.l.b16 %v540
    %v695 = vunpack.c.h.b16 %v540
    %v696 = vunpack.c.l.b16 %v541
    %v697 = vunpack.c.h.b16 %v541
    %v698 = vunpack.c.l.b16 %v542
    %v699 = vunpack.c.h.b16 %v542
    %v700 = vunpack.c.l.b16 %v543
    %v701 = vunpack.c.h.b16 %v543
    %v702 = vunpack.c.l.b16 %v544
    %v703 = vunpack.c.h.b16 %v544
    %v704 = vunpack.c.l.b16 %v545
    %v705 = vunpack.c.h.b16 %v545
    %v706 = vunpack.c.l.b16 %v546
    %v707 = vunpack.c.h.b16 %v546
    %v708 = vunpack.c.l.b16 %v547
    %v709 = vunpack.c.h.b16 %v547
    %v710 = vunpack.c.l.b16 %v548
    %v711 = vunpack.c.h.b16 %v548
    %v712 = vunpack.c.l.b16 %v549
    %v713 = vunpack.c.h.b16 %v549
    %v714 = vunpack.c.l.b16 %v550
    %v715 = vunpack.c.h.b16 %v550
    %v716 = vunpack.c.l.b16 %v551
    %v717 = vunpack.c.h.b16 %v551
    %v718 = vunpack.c.l.b16 %v552
    %v719 = vunpack.c.h.b16 %v552
    %v720 = vunpack.c.l.b16 %v553
    %v721 = vunpack.c.h.b16 %v553
    %v722 = vunpack.c.l.b16 %v554
    %v723 = vunpack.c.h.b16 %v554
    %v724 = vunpack.c.l.b16 %v555
    %v725 = vunpack.c.h.b16 %v555
    %v726 = vunpack.c.l.b16 %v556
    %v727 = vunpack.c.h.b16 %v556
    %v728 = vunpack.c.l.b16 %v557
    %v729 = vunpack.c.h.b16 %v557
    %v730 = vunpack.c.l.b16 %v558
    %v731 = vunpack.c.h.b16 %v558
    %v732 = vunpack.c.l.b16 %v559
    %v733 = vunpack.c.h.b16 %v559
    %v734 = vunpack.c.l.b16 %v560
    %v735 = vunpack.c.h.b16 %v560
    %v736 = vunpack.c.l.b16 %v561
    %v737 = vunpack.c.h.b16 %v561
    %v738 = vunpack.c.l.b16 %v562
    %v739 = vunpack.c.h.b16 %v562
    %v740 = vunpack.c.l.b16 %v563
    %v741 = vunpack.c.h.b16 %v563
    %v742 = vunpack.c.l.b16 %v564
    %v743 = vunpack.c.h.b16 %v564
    %v744 = vunpack.c.l.b16 %v565
    %v745 = vunpack.c.h.b16 %v565
    %v746 = vunpack.c.l.b16 %v566
    %v747 = vunpack.c.h.b16 %v566
    %v748 = vunpack.c.l.b16 %v567
    %v749 = vunpack.c.h.b16 %v567
    %v750 = vunpack.c.l.b16 %v568
    %v751 = vunpack.c.h.b16 %v568
    %v752 = vunpack.c.l.b16 %v569
    %v753 = vunpack.c.h.b16 %v569
    %v754 = vunpack.c.l.b16 %v570
    %v755 = vunpack.c.h.b16 %v570
    %v756 = vunpack.c.l.b16 %v571
    %v757 = vunpack.c.h.b16 %v571
    %v758 = vunpack.c.l.b16 %v572
    %v759 = vunpack.c.h.b16 %v572
    %v760 = vunpack.c.l.b16 %v573
    %v761 = vunpack.c.h.b16 %v573
    %v762 = vunpack.c.l.b16 %v574
    %v763 = vunpack.c.h.b16 %v574
    %v764 = vunpack.c.l.b16 %v575
    %v765 = vunpack.c.h.b16 %v575
    %v766 = vunpack.c.l.b16 %v576
    %v767 = vunpack.c.h.b16 %v576
    %v768 = vunpack.c.l.b16 %v577
    %v769 = vunpack.c.h.b16 %v577
    %v770 = vunpack.c.l.b16 %v578
    %v771 = vunpack.c.h.b16 %v578
    %v772 = vunpack.c.l.b16 %v579
    %v773 = vunpack.c.h.b16 %v579
    %v774 = vunpack.c.l.b16 %v580
    %v775 = vunpack.c.h.b16 %v580
    %v776 = vunpack.c.l.b16 %v581
    %v777 = vunpack.c.h.b16 %v581
    %v778 = vunpack.c.l.b16 %v582
    %v779 = vunpack.c.h.b16 %v582
    %v780 = vunpack.c.l.b16 %v583
    %v781 = vunpack.c.h.b16 %v583
    %v782 = vunpack.c.l.b16 %v584
    %v783 = vunpack.c.h.b16 %v584
    %v784 = vunpack.c.l.b16 %v585
    %v785 = vunpack.c.h.b16 %v585
    %v786 = vunpack.c.l.b16 %v586
    %v787 = vunpack.c.h.b16 %v586
    %v788 = vunpack.c.l.b16 %v587
    %v789 = vunpack.c.h.b16 %v587
    %v790 = vunpack.c.l.b16 %v588
    %v791 = vunpack.c.h.b16 %v588
    %v792 = vunpack.c.l.b16 %v589
    %v793 = vunpack.c.h.b16 %v589
    %v794 = vunpack.c.l.b16 %v590
    %v795 = vunpack.c.h.b16 %v590
    %v796 = vunpack.c.l.b16 %v591
    %v797 = vunpack.c.h.b16 %v591
    %v798 = vunpack.c.l.b16 %v592
    %v799 = vunpack.c.h.b16 %v592
    %v800 = vunpack.c.l.b16 %v593
    %v801 = vunpack.c.h.b16 %v593
    %v802 = vunpack.c.l.b16 %v594
    %v803 = vunpack.c.h.b16 %v594
    %v804 = vunpack.c.l.b16 %v595
    %v805 = vunpack.c.h.b16 %v595
    %v806 = vunpack.c.l.b16 %v596
    %v807 = vunpack.c.h.b16 %v596
    %v808 = vunpack.c.l.b16 %v597
    %v809 = vunpack.c.h.b16 %v597
    %v810 = vunpack.c.l.b16 %v598
    %v811 = vunpack.c.h.b16 %v598
    %v812 = vunpack.c.l.b16 %v599
    %v813 = vunpack.c.h.b16 %v599
    %v814 = vunpack.c.l.b16 %v600
    %v815 = vunpack.c.h.b16 %v600
    %v816 = vunpack.c.l.b16 %v601
    %v817 = vunpack.c.h.b16 %v601
    %v818 = vpack.c.b16 %v694, %v690
    %v819 = vpack.c.b16 %v695, %v691
    %v820 = vpack.c.b16 %v696, %v692
    %v821 = vpack.c.b16 %v697, %v693
    %v822 = vpack.c.b16 %v702, %v698
    %v823 = vpack.c.b16 %v703, %v699
    %v824 = vpack.c.b16 %v704, %v700
    %v825 = vpack.c.b16 %v705, %v701
    %v826 = vpack.c.b16 %v710, %v706
    %v827 = vpack.c.b16 %v711, %v707
    %v828 = vpack.c.b16 %v712, %v708
    %v829 = vpack.c.b16 %v713, %v709
    %v830 = vpack.c.b16 %v718, %v714
    %v831 = vpack.c.b16 %v719, %v715
    %v832 = vpack.c.b16 %v720, %v716
    %v833 = vpack.c.b16 %v721, %v717
    %v834 = vpack.c.b16 %v726, %v722
    %v835 = vpack.c.b16 %v727, %v723
    %v836 = vpack.c.b16 %v728, %v724
    %v837 = vpack.c.b16 %v729, %v725
    %v838 = vpack.c.b16 %v734, %v730
    %v839 = vpack.c.b16 %v735, %v731
    %v840 = vpack.c.b16 %v736, %v732
    %v841 = vpack.c.b16 %v737, %v733
    %v842 = vpack.c.b16 %v742, %v738
    %v843 = vpack.c.b16 %v743, %v739
    %v844 = vpack.c.b16 %v744, %v740
    %v845 = vpack.c.b16 %v745, %v741
    %v846 = vpack.c.b16 %v750, %v746
    %v847 = vpack.c.b16 %v751, %v747
    %v848 = vpack.c.b16 %v752, %v748
    %v849 = vpack.c.b16 %v753, %v749
    %v850 = vpack.c.b16 %v758, %v754
    %v851 = vpack.c.b16 %v759, %v755
    %v852 = vpack.c.b16 %v760, %v756
    %v853 = vpack.c.b16 %v761, %v757
    %v854 = vpack.c.b16 %v766, %v762
    %v855 = vpack.c.b16 %v767, %v763
    %v856 = vpack.c.b16 %v768, %v764
    %v857 = vpack.c.b16 %v769, %v765
    %v858 = vpack.c.b16 %v774, %v770
    %v859 = vpack.c.b16 %v775, %v771
    %v860 = vpack.c.b16 %v776, %v772
    %v861 = vpack.c.b16 %v777, %v773
    %v862 = vpack.c.b16 %v782, %v778
    %v863 = vpack.c.b16 %v783, %v779
    %v864 = vpack.c.b16 %v784, %v780
    %v865 = vpack.c.b16 %v785, %v781
    %v866 = vpack.c.b16 %v790, %v786
    %v867 = vpack.c.b16 %v791, %v787
    %v868 = vpack.c.b16 %v792, %v788
    %v869 = vpack.c.b16 %v793, %v789
    %v870 = vpack.c.b16 %v798, %v794
    %v871 = vpack.c.b16 %v799, %v795
    %v872 = vpack.c.b16 %v800, %v796
    %v873 = vpack.c.b16 %v801, %v797
    %v874 = vpack.c.b16 %v806, %v802
    %v875 = vpack.c.b16 %v807, %v803
    %v876 = vpack.c.b16 %v808, %v804
    %v877 = vpack.c.b16 %v809, %v805
    %v878 = vpack.c.b16 %v814, %v810
    %v879 = vpack.c.b16 %v815, %v811
    %v880 = vpack.c.b16 %v816, %v812
    %v881 = vpack.c.b16 %v817, %v813
    %946 = vmatprep.subr.bf16.mxu0 %v819
    %947 = vmatpush1.bf16.msra.mxu0 %v818
    %948 = vmatprep.subr.bf16.mxu0 %v823
    %949 = vmatpush1.bf16.msra.mxu0 %v822
    %950 = vmatprep.subr.bf16.mxu0 %v827
    %951 = vmatpush1.bf16.msra.mxu0 %v826
    %952 = vmatprep.subr.bf16.mxu0 %v831
    %953 = vmatpush1.bf16.msra.mxu0 %v830
    %954 = vmatprep.subr.bf16.mxu0 %v835
    %955 = vmatpush1.bf16.msra.mxu0 %v834
    %956 = vmatprep.subr.bf16.mxu0 %v839
    %957 = vmatpush1.bf16.msra.mxu0 %v838
    %958 = vmatprep.subr.bf16.mxu0 %v843
    %959 = vmatpush1.bf16.msra.mxu0 %v842
    %960 = vmatprep.subr.bf16.mxu0 %v847
    %961 = vmatpush1.bf16.msra.mxu0 %v846
    %962 = vmatprep.subr.bf16.mxu0 %v851
    %963 = vmatpush1.bf16.msra.mxu0 %v850
    %964 = vmatprep.subr.bf16.mxu0 %v855
    %965 = vmatpush1.bf16.msra.mxu0 %v854
    %966 = vmatprep.subr.bf16.mxu0 %v859
    %967 = vmatpush1.bf16.msra.mxu0 %v858
    %968 = vmatprep.subr.bf16.mxu0 %v863
    %969 = vmatpush1.bf16.msra.mxu0 %v862
    %970 = vmatprep.subr.bf16.mxu0 %v867
    %971 = vmatpush1.bf16.msra.mxu0 %v866
    %972 = vmatprep.subr.bf16.mxu0 %v871
    %973 = vmatpush1.bf16.msra.mxu0 %v870
    %974 = vmatprep.subr.bf16.mxu0 %v875
    %975 = vmatpush1.bf16.msra.mxu0 %v874
    %976 = vmatprep.subr.bf16.mxu0 %v879
    %977 = vmatpush1.bf16.msra.mxu0 %v878
    %978 = vmatprep.mubr.bf16.mxu0 %v604
    %979 = vmatmul.mubr.bf16.gmra.mrb[0].mxu0 %v603
    %v980 = vpop.f32.mrb[0].mxu0
    %v981 = vadd.f32 %v609, %v980
    %v982 = vpop.f32.mrb[0].mxu0
    %v983 = vadd.f32 %v613, %v982
    %v984 = vpop.f32.mrb[0].mxu0
    %v985 = vpop.f32.mrb[0].mxu0
    %986 = vdwg.mxu0
    %987 = vmatprep.subr.bf16.mxu0 %v821
    %988 = vmatpush1.bf16.msra.mxu0 %v820
    %989 = vmatprep.subr.bf16.mxu0 %v825
    %990 = vmatpush1.bf16.msra.mxu0 %v824
    %991 = vmatprep.subr.bf16.mxu0 %v829
    %992 = vmatpush1.bf16.msra.mxu0 %v828
    %993 = vmatprep.subr.bf16.mxu0 %v833
    %994 = vmatpush1.bf16.msra.mxu0 %v832
    %995 = vmatprep.subr.bf16.mxu0 %v837
    %996 = vmatpush1.bf16.msra.mxu0 %v836
    %997 = vmatprep.subr.bf16.mxu0 %v841
    %998 = vmatpush1.bf16.msra.mxu0 %v840
    %999 = vmatprep.subr.bf16.mxu0 %v845
    %1000 = vmatpush1.bf16.msra.mxu0 %v844
    %1001 = vmatprep.subr.bf16.mxu0 %v849
    %1002 = vmatpush1.bf16.msra.mxu0 %v848
    %1003 = vmatprep.subr.bf16.mxu0 %v853
    %1004 = vmatpush1.bf16.msra.mxu0 %v852
    %1005 = vmatprep.subr.bf16.mxu0 %v857
    %1006 = vmatpush1.bf16.msra.mxu0 %v856
    %1007 = vmatprep.subr.bf16.mxu0 %v861
    %1008 = vmatpush1.bf16.msra.mxu0 %v860
    %1009 = vmatprep.subr.bf16.mxu0 %v865
    %1010 = vmatpush1.bf16.msra.mxu0 %v864
    %1011 = vmatprep.subr.bf16.mxu0 %v869
    %1012 = vmatpush1.bf16.msra.mxu0 %v868
    %1013 = vmatprep.subr.bf16.mxu0 %v873
    %1014 = vmatpush1.bf16.msra.mxu0 %v872
    %1015 = vmatprep.subr.bf16.mxu0 %v877
    %1016 = vmatpush1.bf16.msra.mxu0 %v876
    %1017 = vmatprep.subr.bf16.mxu0 %v881
    %1018 = vmatpush1.bf16.msra.mxu0 %v880
    %1019 = vmatprep.mubr.bf16.mxu0 %v604
    %1020 = vmatmul.mubr.bf16.gmra.mrb[0].mxu0 %v603
    %v1021 = vpop.f32.mrb[0].mxu0
    %v1022 = vadd.f32 %v617, %v1021
    %v1023 = vpop.f32.mrb[0].mxu0
    %v1024 = vadd.f32 %v621, %v1023
    %v1025 = vpop.f32.mrb[0].mxu0
    %v1026 = vpop.f32.mrb[0].mxu0
    %1027 = vdwg.mxu0
    %v1028 = vmax.f32 %v981, 0.0
    %v1029 = vmax.f32 %v983, 0.0
    %v1030 = vmax.f32 %v1022, 0.0
    %v1031 = vmax.f32 %v1024, 0.0
    %v1032 = vld [vmem:[%s11] sm:$0xff]
    %v1033 = vld [vmem:[%s11 + $0x8] sm:$0xff]
    %v1034 = vld [vmem:[%s11 + $0x10] sm:$0xff]
    %v1035 = vld [vmem:[%s11 + $0x18] sm:$0xf]
    %v1036 = vld [vmem:[%s11 + $0x1c] sm:$0xff]
    %v1037 = vld [vmem:[%s11 + $0x24] sm:$0xff]
    %v1038 = vld [vmem:[%s11 + $0x2c] sm:$0xff]
    %v1039 = vld [vmem:[%s11 + $0x34] sm:$0xf]
    %v1040 = vld [vmem:[%s11 + $0x38] sm:$0xff]
    %v1041 = vld [vmem:[%s11 + $0x40] sm:$0xff]
    %v1042 = vld [vmem:[%s11 + $0x48] sm:$0xff]
    %v1043 = vld [vmem:[%s11 + $0x50] sm:$0xf]
    %v1044 = vld [vmem:[%s11 + $0x54] sm:$0xff]
    %v1045 = vld [vmem:[%s11 + $0x5c] sm:$0xff]
    %v1046 = vld [vmem:[%s11 + $0x64] sm:$0xff]
    %v1047 = vld [vmem:[%s11 + $0x6c] sm:$0xf]
    %v1048 = vld [vmem:[%s11 + $0x70] sm:$0xff]
    %v1049 = vld [vmem:[%s11 + $0x78] sm:$0xff]
    %v1050 = vld [vmem:[%s11 + $0x80] sm:$0xff]
    %v1051 = vld [vmem:[%s11 + $0x88] sm:$0xf]
    %v1052 = vld [vmem:[%s11 + $0x8c] sm:$0xff]
    %v1053 = vld [vmem:[%s11 + $0x94] sm:$0xff]
    %v1054 = vld [vmem:[%s11 + $0x9c] sm:$0xff]
    %v1055 = vld [vmem:[%s11 + $0xa4] sm:$0xf]
    %v1056 = vld [vmem:[%s11 + $0xa8] sm:$0xff]
    %v1057 = vld [vmem:[%s11 + $0xb0] sm:$0xff]
    %v1058 = vld [vmem:[%s11 + $0xb8] sm:$0xff]
    %v1059 = vld [vmem:[%s11 + $0xc0] sm:$0xf]
    %v1060 = vld [vmem:[%s11 + $0xc4] sm:$0xff]
    %v1061 = vld [vmem:[%s11 + $0xcc] sm:$0xff]
    %v1062 = vld [vmem:[%s11 + $0xd4] sm:$0xff]
    %v1063 = vld [vmem:[%s11 + $0xdc] sm:$0xf]
    %v1064 = vld [vmem:[%s11 + $0xe0] sm:$0xff]
    %v1065 = vld [vmem:[%s11 + $0xe8] sm:$0xff]
    %v1066 = vld [vmem:[%s11 + $0xf0] sm:$0xff]
    %v1067 = vld [vmem:[%s11 + $0xf8] sm:$0xf]
    %v1068 = vld [vmem:[%s11 + $0xfc] sm:$0xff]
    %v1069 = vld [vmem:[%s11 + $0x104] sm:$0xff]
    %v1070 = vld [vmem:[%s11 + $0x10c] sm:$0xff]
    %v1071 = vld [vmem:[%s11 + $0x114] sm:$0xf]
    %v1072 = vld [vmem:[%s11 + $0x118] sm:$0xff]
    %v1073 = vld [vmem:[%s11 + $0x120] sm:$0xff]
    %v1074 = vld [vmem:[%s11 + $0x128] sm:$0xff]
    %v1075 = vld [vmem:[%s11 + $0x130] sm:$0xf]
    %v1076 = vld [vmem:[%s11 + $0x134] sm:$0xff]
    %v1077 = vld [vmem:[%s11 + $0x13c] sm:$0xff]
    %v1078 = vld [vmem:[%s11 + $0x144] sm:$0xff]
    %v1079 = vld [vmem:[%s11 + $0x14c] sm:$0xf]
    %v1080 = vld [vmem:[%s11 + $0x150] sm:$0xff]
    %v1081 = vld [vmem:[%s11 + $0x158] sm:$0xff]
    %v1082 = vld [vmem:[%s11 + $0x160] sm:$0xff]
    %v1083 = vld [vmem:[%s11 + $0x168] sm:$0xf]
    %v1084 = vld [vmem:[%s11 + $0x16c] sm:$0xff]
    %v1085 = vld [vmem:[%s11 + $0x174] sm:$0xff]
    %v1086 = vld [vmem:[%s11 + $0x17c] sm:$0xff]
    %v1087 = vld [vmem:[%s11 + $0x184] sm:$0xf]
    %v1088 = vld [vmem:[%s11 + $0x188] sm:$0xff]
    %v1089 = vld [vmem:[%s11 + $0x190] sm:$0xff]
    %v1090 = vld [vmem:[%s11 + $0x198] sm:$0xff]
    %v1091 = vld [vmem:[%s11 + $0x1a0] sm:$0xf]
    %v1092 = vld [vmem:[%s11 + $0x1a4] sm:$0xff]
    %v1093 = vld [vmem:[%s11 + $0x1ac] sm:$0xff]
    %v1094 = vld [vmem:[%s11 + $0x1b4] sm:$0xff]
    %v1095 = vld [vmem:[%s11 + $0x1bc] sm:$0xf]
    %v1096 = vld [vmem:[%s11 + $0x1c0] sm:$0xff]
    %v1097 = vld [vmem:[%s11 + $0x1c8] sm:$0xff]
    %v1098 = vld [vmem:[%s11 + $0x1d0] sm:$0xff]
    %v1099 = vld [vmem:[%s11 + $0x1d8] sm:$0xf]
    %v1100 = vld [vmem:[%s11 + $0x1dc] sm:$0xff]
    %v1101 = vld [vmem:[%s11 + $0x1e4] sm:$0xff]
    %v1102 = vld [vmem:[%s11 + $0x1ec] sm:$0xff]
    %v1103 = vld [vmem:[%s11 + $0x1f4] sm:$0xf]
    %v1104 = vld [vmem:[%s11 + $0x1f8] sm:$0xff]
    %v1105 = vld [vmem:[%s11 + $0x200] sm:$0xff]
    %v1106 = vld [vmem:[%s11 + $0x208] sm:$0xff]
    %v1107 = vld [vmem:[%s11 + $0x210] sm:$0xf]
    %v1108 = vld [vmem:[%s11 + $0x214] sm:$0xff]
    %v1109 = vld [vmem:[%s11 + $0x21c] sm:$0xff]
    %v1110 = vld [vmem:[%s11 + $0x224] sm:$0xff]
    %v1111 = vld [vmem:[%s11 + $0x22c] sm:$0xf]
    %v1112 = vld [vmem:[%s11 + $0x230] sm:$0xff]
    %v1113 = vld [vmem:[%s11 + $0x238] sm:$0xff]
    %v1114 = vld [vmem:[%s11 + $0x240] sm:$0xff]
    %v1115 = vld [vmem:[%s11 + $0x248] sm:$0xf]
    %v1116 = vld [vmem:[%s11 + $0x24c] sm:$0xff]
    %v1117 = vld [vmem:[%s11 + $0x254] sm:$0xff]
    %v1118 = vld [vmem:[%s11 + $0x25c] sm:$0xff]
    %v1119 = vld [vmem:[%s11 + $0x264] sm:$0xf]
    %v1120 = vld [vmem:[%s11 + $0x268] sm:$0xff]
    %v1121 = vld [vmem:[%s11 + $0x270] sm:$0xff]
    %v1122 = vld [vmem:[%s11 + $0x278] sm:$0xff]
    %v1123 = vld [vmem:[%s11 + $0x280] sm:$0xf]
    %v1124 = vld [vmem:[%s11 + $0x284] sm:$0xff]
    %v1125 = vld [vmem:[%s11 + $0x28c] sm:$0xff]
    %v1126 = vld [vmem:[%s11 + $0x294] sm:$0xff]
    %v1127 = vld [vmem:[%s11 + $0x29c] sm:$0xf]
    %v1128 = vld [vmem:[%s11 + $0x2a0] sm:$0xff]
    %v1129 = vld [vmem:[%s11 + $0x2a8] sm:$0xff]
    %v1130 = vld [vmem:[%s11 + $0x2b0] sm:$0xff]
    %v1131 = vld [vmem:[%s11 + $0x2b8] sm:$0xf]
    %v1132 = vld [vmem:[%s11 + $0x2bc] sm:$0xff]
    %v1133 = vld [vmem:[%s11 + $0x2c4] sm:$0xff]
    %v1134 = vld [vmem:[%s11 + $0x2cc] sm:$0xff]
    %v1135 = vld [vmem:[%s11 + $0x2d4] sm:$0xf]
    %v1136 = vld [vmem:[%s11 + $0x2d8] sm:$0xff]
    %v1137 = vld [vmem:[%s11 + $0x2e0] sm:$0xff]
    %v1138 = vld [vmem:[%s11 + $0x2e8] sm:$0xff]
    %v1139 = vld [vmem:[%s11 + $0x2f0] sm:$0xf]
    %v1140 = vld [vmem:[%s11 + $0x2f4] sm:$0xff]
    %v1141 = vld [vmem:[%s11 + $0x2fc] sm:$0xff]
    %v1142 = vld [vmem:[%s11 + $0x304] sm:$0xff]
    %v1143 = vld [vmem:[%s11 + $0x30c] sm:$0xf]
    %v1144 = vld [vmem:[%s11 + $0x310] sm:$0xff]
    %v1145 = vld [vmem:[%s11 + $0x318] sm:$0xff]
    %v1146 = vld [vmem:[%s11 + $0x320] sm:$0xff]
    %v1147 = vld [vmem:[%s11 + $0x328] sm:$0xf]
    %v1148 = vld [vmem:[%s11 + $0x32c] sm:$0xff]
    %v1149 = vld [vmem:[%s11 + $0x334] sm:$0xff]
    %v1150 = vld [vmem:[%s11 + $0x33c] sm:$0xff]
    %v1151 = vld [vmem:[%s11 + $0x344] sm:$0xf]
    %v1152 = vld [vmem:[%s11 + $0x348] sm:$0xff]
    %v1153 = vld [vmem:[%s11 + $0x350] sm:$0xff]
    %v1154 = vld [vmem:[%s11 + $0x358] sm:$0xff]
    %v1155 = vld [vmem:[%s11 + $0x360] sm:$0xf]
    %v1156 = vld [vmem:[%s11 + $0x364] sm:$0xff]
    %v1157 = vld [vmem:[%s11 + $0x36c] sm:$0xff]
    %v1158 = vld [vmem:[%s11 + $0x374] sm:$0xff]
    %v1159 = vld [vmem:[%s11 + $0x37c] sm:$0xf]
    %v1160 = vld [vmem:[%s11 + $0x380] sm:$0xff]
    %v1161 = vld [vmem:[%s11 + $0x388] sm:$0xff]
    %v1162 = vld [vmem:[%s11 + $0x390] sm:$0xff]
    %v1163 = vld [vmem:[%s11 + $0x398] sm:$0xf]
    %v1164 = vld [vmem:[%s11 + $0x39c] sm:$0xff]
    %v1165 = vld [vmem:[%s11 + $0x3a4] sm:$0xff]
    %v1166 = vld [vmem:[%s11 + $0x3ac] sm:$0xff]
    %v1167 = vld [vmem:[%s11 + $0x3b4] sm:$0xf]
    %v1168 = vld [vmem:[%s11 + $0x3b8] sm:$0xff]
    %v1169 = vld [vmem:[%s11 + $0x3c0] sm:$0xff]
    %v1170 = vld [vmem:[%s11 + $0x3c8] sm:$0xff]
    %v1171 = vld [vmem:[%s11 + $0x3d0] sm:$0xf]
    %v1172 = vld [vmem:[%s11 + $0x3d4] sm:$0xff]
    %v1173 = vld [vmem:[%s11 + $0x3dc] sm:$0xff]
    %v1174 = vld [vmem:[%s11 + $0x3e4] sm:$0xff]
    %v1175 = vld [vmem:[%s11 + $0x3ec] sm:$0xf]
    %v1176 = vld [vmem:[%s11 + $0x3f0] sm:$0xff]
    %v1177 = vld [vmem:[%s11 + $0x3f8] sm:$0xff]
    %v1178 = vld [vmem:[%s11 + $0x400] sm:$0xff]
    %v1179 = vld [vmem:[%s11 + $0x408] sm:$0xf]
    %v1180 = vld [vmem:[%s11 + $0x40c] sm:$0xff]
    %v1181 = vld [vmem:[%s11 + $0x414] sm:$0xff]
    %v1182 = vld [vmem:[%s11 + $0x41c] sm:$0xff]
    %v1183 = vld [vmem:[%s11 + $0x424] sm:$0xf]
    %v1184 = vld [vmem:[%s11 + $0x428] sm:$0xff]
    %v1185 = vld [vmem:[%s11 + $0x430] sm:$0xff]
    %v1186 = vld [vmem:[%s11 + $0x438] sm:$0xff]
    %v1187 = vld [vmem:[%s11 + $0x440] sm:$0xf]
    %v1188 = vld [vmem:[%s11 + $0x444] sm:$0xff]
    %v1189 = vld [vmem:[%s11 + $0x44c] sm:$0xff]
    %v1190 = vld [vmem:[%s11 + $0x454] sm:$0xff]
    %v1191 = vld [vmem:[%s11 + $0x45c] sm:$0xf]
    %v1192 = vld [vmem:[%s11 + $0x460] sm:$0xff]
    %v1193 = vld [vmem:[%s11 + $0x468] sm:$0xff]
    %v1194 = vld [vmem:[%s11 + $0x470] sm:$0xff]
    %v1195 = vld [vmem:[%s11 + $0x478] sm:$0xf]
    %v1196 = vld [vmem:[%s11 + $0x47c] sm:$0xff]
    %v1197 = vld [vmem:[%s11 + $0x484] sm:$0xff]
    %v1198 = vld [vmem:[%s11 + $0x48c] sm:$0xff]
    %v1199 = vld [vmem:[%s11 + $0x494] sm:$0xf]
    %v1200 = vld [vmem:[%s11 + $0x498] sm:$0xff]
    %v1201 = vld [vmem:[%s11 + $0x4a0] sm:$0xff]
    %v1202 = vld [vmem:[%s11 + $0x4a8] sm:$0xff]
    %v1203 = vld [vmem:[%s11 + $0x4b0] sm:$0xf]
    %v1204 = vld [vmem:[%s11 + $0x4b4] sm:$0xff]
    %v1205 = vld [vmem:[%s11 + $0x4bc] sm:$0xff]
    %v1206 = vld [vmem:[%s11 + $0x4c4] sm:$0xff]
    %v1207 = vld [vmem:[%s11 + $0x4cc] sm:$0xf]
    %v1208 = vld [vmem:[%s11 + $0x4d0] sm:$0xff]
    %v1209 = vld [vmem:[%s11 + $0x4d8] sm:$0xff]
    %v1210 = vld [vmem:[%s11 + $0x4e0] sm:$0xff]
    %v1211 = vld [vmem:[%s11 + $0x4e8] sm:$0xf]
    %v1212 = vld [vmem:[%s11 + $0x4ec] sm:$0xff]
    %v1213 = vld [vmem:[%s11 + $0x4f4] sm:$0xff]
    %v1214 = vld [vmem:[%s11 + $0x4fc] sm:$0xff]
    %v1215 = vld [vmem:[%s11 + $0x504] sm:$0xf]
    %v1216 = vld [vmem:[%s11 + $0x508] sm:$0xff]
    %v1217 = vld [vmem:[%s11 + $0x510] sm:$0xff]
    %v1218 = vld [vmem:[%s11 + $0x518] sm:$0xff]
    %v1219 = vld [vmem:[%s11 + $0x520] sm:$0xf]
    %v1220 = vld [vmem:[%s11 + $0x524] sm:$0xff]
    %v1221 = vld [vmem:[%s11 + $0x52c] sm:$0xff]
    %v1222 = vld [vmem:[%s11 + $0x534] sm:$0xff]
    %v1223 = vld [vmem:[%s11 + $0x53c] sm:$0xf]
    %v1224 = vld [vmem:[%s11 + $0x540] sm:$0xff]
    %v1225 = vld [vmem:[%s11 + $0x548] sm:$0xff]
    %v1226 = vld [vmem:[%s11 + $0x550] sm:$0xff]
    %v1227 = vld [vmem:[%s11 + $0x558] sm:$0xf]
    %v1228 = vld [vmem:[%s11 + $0x55c] sm:$0xff]
    %v1229 = vld [vmem:[%s11 + $0x564] sm:$0xff]
    %v1230 = vld [vmem:[%s11 + $0x56c] sm:$0xff]
    %v1231 = vld [vmem:[%s11 + $0x574] sm:$0xf]
    %v1232 = vld [vmem:[%s11 + $0x578] sm:$0xff]
    %v1233 = vld [vmem:[%s11 + $0x580] sm:$0xff]
    %v1234 = vld [vmem:[%s11 + $0x588] sm:$0xff]
    %v1235 = vld [vmem:[%s11 + $0x590] sm:$0xf]
    %v1236 = vld [vmem:[%s11 + $0x594] sm:$0xff]
    %v1237 = vld [vmem:[%s11 + $0x59c] sm:$0xff]
    %v1238 = vld [vmem:[%s11 + $0x5a4] sm:$0xff]
    %v1239 = vld [vmem:[%s11 + $0x5ac] sm:$0xf]
    %v1240 = vld [vmem:[%s11 + $0x5b0] sm:$0xff]
    %v1241 = vld [vmem:[%s11 + $0x5b8] sm:$0xff]
    %v1242 = vld [vmem:[%s11 + $0x5c0] sm:$0xff]
    %v1243 = vld [vmem:[%s11 + $0x5c8] sm:$0xf]
    %v1244 = vld [vmem:[%s11 + $0x5cc] sm:$0xff]
    %v1245 = vld [vmem:[%s11 + $0x5d4] sm:$0xff]
    %v1246 = vld [vmem:[%s11 + $0x5dc] sm:$0xff]
    %v1247 = vld [vmem:[%s11 + $0x5e4] sm:$0xf]
    %v1248 = vld [vmem:[%s11 + $0x5e8] sm:$0xff]
    %v1249 = vld [vmem:[%s11 + $0x5f0] sm:$0xff]
    %v1250 = vld [vmem:[%s11 + $0x5f8] sm:$0xff]
    %v1251 = vld [vmem:[%s11 + $0x600] sm:$0xf]
    %v1252 = vld [vmem:[%s11 + $0x604] sm:$0xff]
    %v1253 = vld [vmem:[%s11 + $0x60c] sm:$0xff]
    %v1254 = vld [vmem:[%s11 + $0x614] sm:$0xff]
    %v1255 = vld [vmem:[%s11 + $0x61c] sm:$0xf]
    %v1256 = vld [vmem:[%s11 + $0x620] sm:$0xff]
    %v1257 = vld [vmem:[%s11 + $0x628] sm:$0xff]
    %v1258 = vld [vmem:[%s11 + $0x630] sm:$0xff]
    %v1259 = vld [vmem:[%s11 + $0x638] sm:$0xf]
    %v1260 = vld [vmem:[%s11 + $0x63c] sm:$0xff]
    %v1261 = vld [vmem:[%s11 + $0x644] sm:$0xff]
    %v1262 = vld [vmem:[%s11 + $0x64c] sm:$0xff]
    %v1263 = vld [vmem:[%s11 + $0x654] sm:$0xf]
    %v1264 = vld [vmem:[%s11 + $0x658] sm:$0xff]
    %v1265 = vld [vmem:[%s11 + $0x660] sm:$0xff]
    %v1266 = vld [vmem:[%s11 + $0x668] sm:$0xff]
    %v1267 = vld [vmem:[%s11 + $0x670] sm:$0xf]
    %v1268 = vld [vmem:[%s11 + $0x674] sm:$0xff]
    %v1269 = vld [vmem:[%s11 + $0x67c] sm:$0xff]
    %v1270 = vld [vmem:[%s11 + $0x684] sm:$0xff]
    %v1271 = vld [vmem:[%s11 + $0x68c] sm:$0xf]
    %v1272 = vld [vmem:[%s11 + $0x690] sm:$0xff]
    %v1273 = vld [vmem:[%s11 + $0x698] sm:$0xff]
    %v1274 = vld [vmem:[%s11 + $0x6a0] sm:$0xff]
    %v1275 = vld [vmem:[%s11 + $0x6a8] sm:$0xf]
    %v1276 = vld [vmem:[%s11 + $0x6ac] sm:$0xff]
    %v1277 = vld [vmem:[%s11 + $0x6b4] sm:$0xff]
    %v1278 = vld [vmem:[%s11 + $0x6bc] sm:$0xff]
    %v1279 = vld [vmem:[%s11 + $0x6c4] sm:$0xf]
    %v1280 = vld [vmem:[%s11 + $0x6c8] sm:$0xff]
    %v1281 = vld [vmem:[%s11 + $0x6d0] sm:$0xff]
    %v1282 = vld [vmem:[%s11 + $0x6d8] sm:$0xff]
    %v1283 = vld [vmem:[%s11 + $0x6e0] sm:$0xf]
    %v1284 = vld [vmem:[%s11 + $0x6e4] sm:$0xff]
    %v1285 = vld [vmem:[%s11 + $0x6ec] sm:$0xff]
    %v1286 = vld [vmem:[%s11 + $0x6f4] sm:$0xff]
    %v1287 = vld [vmem:[%s11 + $0x6fc] sm:$0xf]
    %v1288 = vld [vmem:[%s12] sm:$0x7f]
    %v1289 = vpack.c.bf16 %v1028, %v1028
    %v1290 = vpack.c.bf16 %v1029, %v1029
    %v1291 = vpack.c.bf16 %v1030, %v1030
    %v1292 = vpack.c.bf16 %v1031, %v1031
    %v1294 = vlaneseq
    %v1295 = vshrl.u32 %v1294, 7
    %v1296 = vsub.s32 0, %v1295
    %v1297 = vrot.slane %v1288, %v1296
    %v1298 = vlaneseq
    %v1299 = vshrl.u32 %v1298, 7
    %v1300 = vsub.s32 1, %v1299
    %v1301 = vrot.slane %v1288, %v1300
    %v1302 = vlaneseq
    %v1303 = vshrl.u32 %v1302, 7
    %v1304 = vsub.s32 2, %v1303
    %v1305 = vrot.slane %v1288, %v1304
    %v1306 = vlaneseq
    %v1307 = vshrl.u32 %v1306, 7
    %v1308 = vsub.s32 3, %v1307
    %v1309 = vrot.slane %v1288, %v1308
    %v1310 = vlaneseq
    %v1311 = vshrl.u32 %v1310, 7
    %v1312 = vsub.s32 4, %v1311
    %v1313 = vrot.slane %v1288, %v1312
    %v1314 = vlaneseq
    %v1315 = vshrl.u32 %v1314, 7
    %v1316 = vsub.s32 5, %v1315
    %v1317 = vrot.slane %v1288, %v1316
    %v1318 = vlaneseq
    %v1319 = vshrl.u32 %v1318, 7
    %v1320 = vsub.s32 6, %v1319
    %v1321 = vrot.slane %v1288, %v1320
    %v1585 = vunpack.c.l.b16 %v1032
    %v1586 = vunpack.c.h.b16 %v1032
    %v1587 = vunpack.c.l.b16 %v1033
    %v1588 = vunpack.c.h.b16 %v1033
    %v1589 = vunpack.c.l.b16 %v1034
    %v1590 = vunpack.c.h.b16 %v1034
    %v1591 = vunpack.c.l.b16 %v1035
    %v1592 = vunpack.c.l.b16 %v1036
    %v1593 = vunpack.c.h.b16 %v1036
    %v1594 = vunpack.c.l.b16 %v1037
    %v1595 = vunpack.c.h.b16 %v1037
    %v1596 = vunpack.c.l.b16 %v1038
    %v1597 = vunpack.c.h.b16 %v1038
    %v1598 = vunpack.c.l.b16 %v1039
    %v1599 = vunpack.c.l.b16 %v1040
    %v1600 = vunpack.c.h.b16 %v1040
    %v1601 = vunpack.c.l.b16 %v1041
    %v1602 = vunpack.c.h.b16 %v1041
    %v1603 = vunpack.c.l.b16 %v1042
    %v1604 = vunpack.c.h.b16 %v1042
    %v1605 = vunpack.c.l.b16 %v1043
    %v1606 = vunpack.c.l.b16 %v1044
    %v1607 = vunpack.c.h.b16 %v1044
    %v1608 = vunpack.c.l.b16 %v1045
    %v1609 = vunpack.c.h.b16 %v1045
    %v1610 = vunpack.c.l.b16 %v1046
    %v1611 = vunpack.c.h.b16 %v1046
    %v1612 = vunpack.c.l.b16 %v1047
    %v1613 = vunpack.c.l.b16 %v1048
    %v1614 = vunpack.c.h.b16 %v1048
    %v1615 = vunpack.c.l.b16 %v1049
    %v1616 = vunpack.c.h.b16 %v1049
    %v1617 = vunpack.c.l.b16 %v1050
    %v1618 = vunpack.c.h.b16 %v1050
    %v1619 = vunpack.c.l.b16 %v1051
    %v1620 = vunpack.c.l.b16 %v1052
    %v1621 = vunpack.c.h.b16 %v1052
    %v1622 = vunpack.c.l.b16 %v1053
    %v1623 = vunpack.c.h.b16 %v1053
    %v1624 = vunpack.c.l.b16 %v1054
    %v1625 = vunpack.c.h.b16 %v1054
    %v1626 = vunpack.c.l.b16 %v1055
    %v1627 = vunpack.c.l.b16 %v1056
    %v1628 = vunpack.c.h.b16 %v1056
    %v1629 = vunpack.c.l.b16 %v1057
    %v1630 = vunpack.c.h.b16 %v1057
    %v1631 = vunpack.c.l.b16 %v1058
    %v1632 = vunpack.c.h.b16 %v1058
    %v1633 = vunpack.c.l.b16 %v1059
    %v1634 = vunpack.c.l.b16 %v1060
    %v1635 = vunpack.c.h.b16 %v1060
    %v1636 = vunpack.c.l.b16 %v1061
    %v1637 = vunpack.c.h.b16 %v1061
    %v1638 = vunpack.c.l.b16 %v1062
    %v1639 = vunpack.c.h.b16 %v1062
    %v1640 = vunpack.c.l.b16 %v1063
    %v1641 = vunpack.c.l.b16 %v1064
    %v1642 = vunpack.c.h.b16 %v1064
    %v1643 = vunpack.c.l.b16 %v1065
    %v1644 = vunpack.c.h.b16 %v1065
    %v1645 = vunpack.c.l.b16 %v1066
    %v1646 = vunpack.c.h.b16 %v1066
    %v1647 = vunpack.c.l.b16 %v1067
    %v1648 = vunpack.c.l.b16 %v1068
    %v1649 = vunpack.c.h.b16 %v1068
    %v1650 = vunpack.c.l.b16 %v1069
    %v1651 = vunpack.c.h.b16 %v1069
    %v1652 = vunpack.c.l.b16 %v1070
    %v1653 = vunpack.c.h.b16 %v1070
    %v1654 = vunpack.c.l.b16 %v1071
    %v1655 = vunpack.c.l.b16 %v1072
    %v1656 = vunpack.c.h.b16 %v1072
    %v1657 = vunpack.c.l.b16 %v1073
    %v1658 = vunpack.c.h.b16 %v1073
    %v1659 = vunpack.c.l.b16 %v1074
    %v1660 = vunpack.c.h.b16 %v1074
    %v1661 = vunpack.c.l.b16 %v1075
    %v1662 = vunpack.c.l.b16 %v1076
    %v1663 = vunpack.c.h.b16 %v1076
    %v1664 = vunpack.c.l.b16 %v1077
    %v1665 = vunpack.c.h.b16 %v1077
    %v1666 = vunpack.c.l.b16 %v1078
    %v1667 = vunpack.c.h.b16 %v1078
    %v1668 = vunpack.c.l.b16 %v1079
    %v1669 = vunpack.c.l.b16 %v1080
    %v1670 = vunpack.c.h.b16 %v1080
    %v1671 = vunpack.c.l.b16 %v1081
    %v1672 = vunpack.c.h.b16 %v1081
    %v1673 = vunpack.c.l.b16 %v1082
    %v1674 = vunpack.c.h.b16 %v1082
    %v1675 = vunpack.c.l.b16 %v1083
    %v1676 = vunpack.c.l.b16 %v1084
    %v1677 = vunpack.c.h.b16 %v1084
    %v1678 = vunpack.c.l.b16 %v1085
    %v1679 = vunpack.c.h.b16 %v1085
    %v1680 = vunpack.c.l.b16 %v1086
    %v1681 = vunpack.c.h.b16 %v1086
    %v1682 = vunpack.c.l.b16 %v1087
    %v1683 = vunpack.c.l.b16 %v1088
    %v1684 = vunpack.c.h.b16 %v1088
    %v1685 = vunpack.c.l.b16 %v1089
    %v1686 = vunpack.c.h.b16 %v1089
    %v1687 = vunpack.c.l.b16 %v1090
    %v1688 = vunpack.c.h.b16 %v1090
    %v1689 = vunpack.c.l.b16 %v1091
    %v1690 = vunpack.c.l.b16 %v1092
    %v1691 = vunpack.c.h.b16 %v1092
    %v1692 = vunpack.c.l.b16 %v1093
    %v1693 = vunpack.c.h.b16 %v1093
    %v1694 = vunpack.c.l.b16 %v1094
    %v1695 = vunpack.c.h.b16 %v1094
    %v1696 = vunpack.c.l.b16 %v1095
    %v1697 = vunpack.c.l.b16 %v1096
    %v1698 = vunpack.c.h.b16 %v1096
    %v1699 = vunpack.c.l.b16 %v1097
    %v1700 = vunpack.c.h.b16 %v1097
    %v1701 = vunpack.c.l.b16 %v1098
    %v1702 = vunpack.c.h.b16 %v1098
    %v1703 = vunpack.c.l.b16 %v1099
    %v1704 = vunpack.c.l.b16 %v1100
    %v1705 = vunpack.c.h.b16 %v1100
    %v1706 = vunpack.c.l.b16 %v1101
    %v1707 = vunpack.c.h.b16 %v1101
    %v1708 = vunpack.c.l.b16 %v1102
    %v1709 = vunpack.c.h.b16 %v1102
    %v1710 = vunpack.c.l.b16 %v1103
    %v1711 = vunpack.c.l.b16 %v1104
    %v1712 = vunpack.c.h.b16 %v1104
    %v1713 = vunpack.c.l.b16 %v1105
    %v1714 = vunpack.c.h.b16 %v1105
    %v1715 = vunpack.c.l.b16 %v1106
    %v1716 = vunpack.c.h.b16 %v1106
    %v1717 = vunpack.c.l.b16 %v1107
    %v1718 = vunpack.c.l.b16 %v1108
    %v1719 = vunpack.c.h.b16 %v1108
    %v1720 = vunpack.c.l.b16 %v1109
    %v1721 = vunpack.c.h.b16 %v1109
    %v1722 = vunpack.c.l.b16 %v1110
    %v1723 = vunpack.c.h.b16 %v1110
    %v1724 = vunpack.c.l.b16 %v1111
    %v1725 = vunpack.c.l.b16 %v1112
    %v1726 = vunpack.c.h.b16 %v1112
    %v1727 = vunpack.c.l.b16 %v1113
    %v1728 = vunpack.c.h.b16 %v1113
    %v1729 = vunpack.c.l.b16 %v1114
    %v1730 = vunpack.c.h.b16 %v1114
    %v1731 = vunpack.c.l.b16 %v1115
    %v1732 = vunpack.c.l.b16 %v1116
    %v1733 = vunpack.c.h.b16 %v1116
    %v1734 = vunpack.c.l.b16 %v1117
    %v1735 = vunpack.c.h.b16 %v1117
    %v1736 = vunpack.c.l.b16 %v1118
    %v1737 = vunpack.c.h.b16 %v1118
    %v1738 = vunpack.c.l.b16 %v1119
    %v1739 = vunpack.c.l.b16 %v1120
    %v1740 = vunpack.c.h.b16 %v1120
    %v1741 = vunpack.c.l.b16 %v1121
    %v1742 = vunpack.c.h.b16 %v1121
    %v1743 = vunpack.c.l.b16 %v1122
    %v1744 = vunpack.c.h.b16 %v1122
    %v1745 = vunpack.c.l.b16 %v1123
    %v1746 = vunpack.c.l.b16 %v1124
    %v1747 = vunpack.c.h.b16 %v1124
    %v1748 = vunpack.c.l.b16 %v1125
    %v1749 = vunpack.c.h.b16 %v1125
    %v1750 = vunpack.c.l.b16 %v1126
    %v1751 = vunpack.c.h.b16 %v1126
    %v1752 = vunpack.c.l.b16 %v1127
    %v1753 = vunpack.c.l.b16 %v1128
    %v1754 = vunpack.c.h.b16 %v1128
    %v1755 = vunpack.c.l.b16 %v1129
    %v1756 = vunpack.c.h.b16 %v1129
    %v1757 = vunpack.c.l.b16 %v1130
    %v1758 = vunpack.c.h.b16 %v1130
    %v1759 = vunpack.c.l.b16 %v1131
    %v1760 = vunpack.c.l.b16 %v1132
    %v1761 = vunpack.c.h.b16 %v1132
    %v1762 = vunpack.c.l.b16 %v1133
    %v1763 = vunpack.c.h.b16 %v1133
    %v1764 = vunpack.c.l.b16 %v1134
    %v1765 = vunpack.c.h.b16 %v1134
    %v1766 = vunpack.c.l.b16 %v1135
    %v1767 = vunpack.c.l.b16 %v1136
    %v1768 = vunpack.c.h.b16 %v1136
    %v1769 = vunpack.c.l.b16 %v1137
    %v1770 = vunpack.c.h.b16 %v1137
    %v1771 = vunpack.c.l.b16 %v1138
    %v1772 = vunpack.c.h.b16 %v1138
    %v1773 = vunpack.c.l.b16 %v1139
    %v1774 = vunpack.c.l.b16 %v1140
    %v1775 = vunpack.c.h.b16 %v1140
    %v1776 = vunpack.c.l.b16 %v1141
    %v1777 = vunpack.c.h.b16 %v1141
    %v1778 = vunpack.c.l.b16 %v1142
    %v1779 = vunpack.c.h.b16 %v1142
    %v1780 = vunpack.c.l.b16 %v1143
    %v1781 = vunpack.c.l.b16 %v1144
    %v1782 = vunpack.c.h.b16 %v1144
    %v1783 = vunpack.c.l.b16 %v1145
    %v1784 = vunpack.c.h.b16 %v1145
    %v1785 = vunpack.c.l.b16 %v1146
    %v1786 = vunpack.c.h.b16 %v1146
    %v1787 = vunpack.c.l.b16 %v1147
    %v1788 = vunpack.c.l.b16 %v1148
    %v1789 = vunpack.c.h.b16 %v1148
    %v1790 = vunpack.c.l.b16 %v1149
    %v1791 = vunpack.c.h.b16 %v1149
    %v1792 = vunpack.c.l.b16 %v1150
    %v1793 = vunpack.c.h.b16 %v1150
    %v1794 = vunpack.c.l.b16 %v1151
    %v1795 = vunpack.c.l.b16 %v1152
    %v1796 = vunpack.c.h.b16 %v1152
    %v1797 = vunpack.c.l.b16 %v1153
    %v1798 = vunpack.c.h.b16 %v1153
    %v1799 = vunpack.c.l.b16 %v1154
    %v1800 = vunpack.c.h.b16 %v1154
    %v1801 = vunpack.c.l.b16 %v1155
    %v1802 = vunpack.c.l.b16 %v1156
    %v1803 = vunpack.c.h.b16 %v1156
    %v1804 = vunpack.c.l.b16 %v1157
    %v1805 = vunpack.c.h.b16 %v1157
    %v1806 = vunpack.c.l.b16 %v1158
    %v1807 = vunpack.c.h.b16 %v1158
    %v1808 = vunpack.c.l.b16 %v1159
    %v1809 = vunpack.c.l.b16 %v1160
    %v1810 = vunpack.c.h.b16 %v1160
    %v1811 = vunpack.c.l.b16 %v1161
    %v1812 = vunpack.c.h.b16 %v1161
    %v1813 = vunpack.c.l.b16 %v1162
    %v1814 = vunpack.c.h.b16 %v1162
    %v1815 = vunpack.c.l.b16 %v1163
    %v1816 = vunpack.c.l.b16 %v1164
    %v1817 = vunpack.c.h.b16 %v1164
    %v1818 = vunpack.c.l.b16 %v1165
    %v1819 = vunpack.c.h.b16 %v1165
    %v1820 = vunpack.c.l.b16 %v1166
    %v1821 = vunpack.c.h.b16 %v1166
    %v1822 = vunpack.c.l.b16 %v1167
    %v1823 = vunpack.c.l.b16 %v1168
    %v1824 = vunpack.c.h.b16 %v1168
    %v1825 = vunpack.c.l.b16 %v1169
    %v1826 = vunpack.c.h.b16 %v1169
    %v1827 = vunpack.c.l.b16 %v1170
    %v1828 = vunpack.c.h.b16 %v1170
    %v1829 = vunpack.c.l.b16 %v1171
    %v1830 = vunpack.c.l.b16 %v1172
    %v1831 = vunpack.c.h.b16 %v1172
    %v1832 = vunpack.c.l.b16 %v1173
    %v1833 = vunpack.c.h.b16 %v1173
    %v1834 = vunpack.c.l.b16 %v1174
    %v1835 = vunpack.c.h.b16 %v1174
    %v1836 = vunpack.c.l.b16 %v1175
    %v1837 = vunpack.c.l.b16 %v1176
    %v1838 = vunpack.c.h.b16 %v1176
    %v1839 = vunpack.c.l.b16 %v1177
    %v1840 = vunpack.c.h.b16 %v1177
    %v1841 = vunpack.c.l.b16 %v1178
    %v1842 = vunpack.c.h.b16 %v1178
    %v1843 = vunpack.c.l.b16 %v1179
    %v1844 = vunpack.c.l.b16 %v1180
    %v1845 = vunpack.c.h.b16 %v1180
    %v1846 = vunpack.c.l.b16 %v1181
    %v1847 = vunpack.c.h.b16 %v1181
    %v1848 = vunpack.c.l.b16 %v1182
    %v1849 = vunpack.c.h.b16 %v1182
    %v1850 = vunpack.c.l.b16 %v1183
    %v1851 = vunpack.c.l.b16 %v1184
    %v1852 = vunpack.c.h.b16 %v1184
    %v1853 = vunpack.c.l.b16 %v1185
    %v1854 = vunpack.c.h.b16 %v1185
    %v1855 = vunpack.c.l.b16 %v1186
    %v1856 = vunpack.c.h.b16 %v1186
    %v1857 = vunpack.c.l.b16 %v1187
    %v1858 = vunpack.c.l.b16 %v1188
    %v1859 = vunpack.c.h.b16 %v1188
    %v1860 = vunpack.c.l.b16 %v1189
    %v1861 = vunpack.c.h.b16 %v1189
    %v1862 = vunpack.c.l.b16 %v1190
    %v1863 = vunpack.c.h.b16 %v1190
    %v1864 = vunpack.c.l.b16 %v1191
    %v1865 = vunpack.c.l.b16 %v1192
    %v1866 = vunpack.c.h.b16 %v1192
    %v1867 = vunpack.c.l.b16 %v1193
    %v1868 = vunpack.c.h.b16 %v1193
    %v1869 = vunpack.c.l.b16 %v1194
    %v1870 = vunpack.c.h.b16 %v1194
    %v1871 = vunpack.c.l.b16 %v1195
    %v1872 = vunpack.c.l.b16 %v1196
    %v1873 = vunpack.c.h.b16 %v1196
    %v1874 = vunpack.c.l.b16 %v1197
    %v1875 = vunpack.c.h.b16 %v1197
    %v1876 = vunpack.c.l.b16 %v1198
    %v1877 = vunpack.c.h.b16 %v1198
    %v1878 = vunpack.c.l.b16 %v1199
    %v1879 = vunpack.c.l.b16 %v1200
    %v1880 = vunpack.c.h.b16 %v1200
    %v1881 = vunpack.c.l.b16 %v1201
    %v1882 = vunpack.c.h.b16 %v1201
    %v1883 = vunpack.c.l.b16 %v1202
    %v1884 = vunpack.c.h.b16 %v1202
    %v1885 = vunpack.c.l.b16 %v1203
    %v1886 = vunpack.c.l.b16 %v1204
    %v1887 = vunpack.c.h.b16 %v1204
    %v1888 = vunpack.c.l.b16 %v1205
    %v1889 = vunpack.c.h.b16 %v1205
    %v1890 = vunpack.c.l.b16 %v1206
    %v1891 = vunpack.c.h.b16 %v1206
    %v1892 = vunpack.c.l.b16 %v1207
    %v1893 = vunpack.c.l.b16 %v1208
    %v1894 = vunpack.c.h.b16 %v1208
    %v1895 = vunpack.c.l.b16 %v1209
    %v1896 = vunpack.c.h.b16 %v1209
    %v1897 = vunpack.c.l.b16 %v1210
    %v1898 = vunpack.c.h.b16 %v1210
    %v1899 = vunpack.c.l.b16 %v1211
    %v1900 = vunpack.c.l.b16 %v1212
    %v1901 = vunpack.c.h.b16 %v1212
    %v1902 = vunpack.c.l.b16 %v1213
    %v1903 = vunpack.c.h.b16 %v1213
    %v1904 = vunpack.c.l.b16 %v1214
    %v1905 = vunpack.c.h.b16 %v1214
    %v1906 = vunpack.c.l.b16 %v1215
    %v1907 = vunpack.c.l.b16 %v1216
    %v1908 = vunpack.c.h.b16 %v1216
    %v1909 = vunpack.c.l.b16 %v1217
    %v1910 = vunpack.c.h.b16 %v1217
    %v1911 = vunpack.c.l.b16 %v1218
    %v1912 = vunpack.c.h.b16 %v1218
    %v1913 = vunpack.c.l.b16 %v1219
    %v1914 = vunpack.c.l.b16 %v1220
    %v1915 = vunpack.c.h.b16 %v1220
    %v1916 = vunpack.c.l.b16 %v1221
    %v1917 = vunpack.c.h.b16 %v1221
    %v1918 = vunpack.c.l.b16 %v1222
    %v1919 = vunpack.c.h.b16 %v1222
    %v1920 = vunpack.c.l.b16 %v1223
    %v1921 = vunpack.c.l.b16 %v1224
    %v1922 = vunpack.c.h.b16 %v1224
    %v1923 = vunpack.c.l.b16 %v1225
    %v1924 = vunpack.c.h.b16 %v1225
    %v1925 = vunpack.c.l.b16 %v1226
    %v1926 = vunpack.c.h.b16 %v1226
    %v1927 = vunpack.c.l.b16 %v1227
    %v1928 = vunpack.c.l.b16 %v1228
    %v1929 = vunpack.c.h.b16 %v1228
    %v1930 = vunpack.c.l.b16 %v1229
    %v1931 = vunpack.c.h.b16 %v1229
    %v1932 = vunpack.c.l.b16 %v1230
    %v1933 = vunpack.c.h.b16 %v1230
    %v1934 = vunpack.c.l.b16 %v1231
    %v1935 = vunpack.c.l.b16 %v1232
    %v1936 = vunpack.c.h.b16 %v1232
    %v1937 = vunpack.c.l.b16 %v1233
    %v1938 = vunpack.c.h.b16 %v1233
    %v1939 = vunpack.c.l.b16 %v1234
    %v1940 = vunpack.c.h.b16 %v1234
    %v1941 = vunpack.c.l.b16 %v1235
    %v1942 = vunpack.c.l.b16 %v1236
    %v1943 = vunpack.c.h.b16 %v1236
    %v1944 = vunpack.c.l.b16 %v1237
    %v1945 = vunpack.c.h.b16 %v1237
    %v1946 = vunpack.c.l.b16 %v1238
    %v1947 = vunpack.c.h.b16 %v1238
    %v1948 = vunpack.c.l.b16 %v1239
    %v1949 = vunpack.c.l.b16 %v1240
    %v1950 = vunpack.c.h.b16 %v1240
    %v1951 = vunpack.c.l.b16 %v1241
    %v1952 = vunpack.c.h.b16 %v1241
    %v1953 = vunpack.c.l.b16 %v1242
    %v1954 = vunpack.c.h.b16 %v1242
    %v1955 = vunpack.c.l.b16 %v1243
    %v1956 = vunpack.c.l.b16 %v1244
    %v1957 = vunpack.c.h.b16 %v1244
    %v1958 = vunpack.c.l.b16 %v1245
    %v1959 = vunpack.c.h.b16 %v1245
    %v1960 = vunpack.c.l.b16 %v1246
    %v1961 = vunpack.c.h.b16 %v1246
    %v1962 = vunpack.c.l.b16 %v1247
    %v1963 = vunpack.c.l.b16 %v1248
    %v1964 = vunpack.c.h.b16 %v1248
    %v1965 = vunpack.c.l.b16 %v1249
    %v1966 = vunpack.c.h.b16 %v1249
    %v1967 = vunpack.c.l.b16 %v1250
    %v1968 = vunpack.c.h.b16 %v1250
    %v1969 = vunpack.c.l.b16 %v1251
    %v1970 = vunpack.c.l.b16 %v1252
    %v1971 = vunpack.c.h.b16 %v1252
    %v1972 = vunpack.c.l.b16 %v1253
    %v1973 = vunpack.c.h.b16 %v1253
    %v1974 = vunpack.c.l.b16 %v1254
    %v1975 = vunpack.c.h.b16 %v1254
    %v1976 = vunpack.c.l.b16 %v1255
    %v1977 = vunpack.c.l.b16 %v1256
    %v1978 = vunpack.c.h.b16 %v1256
    %v1979 = vunpack.c.l.b16 %v1257
    %v1980 = vunpack.c.h.b16 %v1257
    %v1981 = vunpack.c.l.b16 %v1258
    %v1982 = vunpack.c.h.b16 %v1258
    %v1983 = vunpack.c.l.b16 %v1259
    %v1984 = vunpack.c.l.b16 %v1260
    %v1985 = vunpack.c.h.b16 %v1260
    %v1986 = vunpack.c.l.b16 %v1261
    %v1987 = vunpack.c.h.b16 %v1261
    %v1988 = vunpack.c.l.b16 %v1262
    %v1989 = vunpack.c.h.b16 %v1262
    %v1990 = vunpack.c.l.b16 %v1263
    %v1991 = vunpack.c.l.b16 %v1264
    %v1992 = vunpack.c.h.b16 %v1264
    %v1993 = vunpack.c.l.b16 %v1265
    %v1994 = vunpack.c.h.b16 %v1265
    %v1995 = vunpack.c.l.b16 %v1266
    %v1996 = vunpack.c.h.b16 %v1266
    %v1997 = vunpack.c.l.b16 %v1267
    %v1998 = vunpack.c.l.b16 %v1268
    %v1999 = vunpack.c.h.b16 %v1268
    %v2000 = vunpack.c.l.b16 %v1269
    %v2001 = vunpack.c.h.b16 %v1269
    %v2002 = vunpack.c.l.b16 %v1270
    %v2003 = vunpack.c.h.b16 %v1270
    %v2004 = vunpack.c.l.b16 %v1271
    %v2005 = vunpack.c.l.b16 %v1272
    %v2006 = vunpack.c.h.b16 %v1272
    %v2007 = vunpack.c.l.b16 %v1273
    %v2008 = vunpack.c.h.b16 %v1273
    %v2009 = vunpack.c.l.b16 %v1274
    %v2010 = vunpack.c.h.b16 %v1274
    %v2011 = vunpack.c.l.b16 %v1275
    %v2012 = vunpack.c.l.b16 %v1276
    %v2013 = vunpack.c.h.b16 %v1276
    %v2014 = vunpack.c.l.b16 %v1277
    %v2015 = vunpack.c.h.b16 %v1277
    %v2016 = vunpack.c.l.b16 %v1278
    %v2017 = vunpack.c.h.b16 %v1278
    %v2018 = vunpack.c.l.b16 %v1279
    %v2019 = vunpack.c.l.b16 %v1280
    %v2020 = vunpack.c.h.b16 %v1280
    %v2021 = vunpack.c.l.b16 %v1281
    %v2022 = vunpack.c.h.b16 %v1281
    %v2023 = vunpack.c.l.b16 %v1282
    %v2024 = vunpack.c.h.b16 %v1282
    %v2025 = vunpack.c.l.b16 %v1283
    %v2026 = vunpack.c.l.b16 %v1284
    %v2027 = vunpack.c.h.b16 %v1284
    %v2028 = vunpack.c.l.b16 %v1285
    %v2029 = vunpack.c.h.b16 %v1285
    %v2030 = vunpack.c.l.b16 %v1286
    %v2031 = vunpack.c.h.b16 %v1286
    %v2032 = vunpack.c.l.b16 %v1287
    %v2033 = vpack.c.b16 %v1592, %v1585
    %v2034 = vpack.c.b16 %v1593, %v1586
    %v2035 = vpack.c.b16 %v1594, %v1587
    %v2036 = vpack.c.b16 %v1595, %v1588
    %v2037 = vpack.c.b16 %v1596, %v1589
    %v2038 = vpack.c.b16 %v1597, %v1590
    %v2039 = vpack.c.b16 %v1598, %v1591
    %v2040 = vpack.c.b16 %v1606, %v1599
    %v2041 = vpack.c.b16 %v1607, %v1600
    %v2042 = vpack.c.b16 %v1608, %v1601
    %v2043 = vpack.c.b16 %v1609, %v1602
    %v2044 = vpack.c.b16 %v1610, %v1603
    %v2045 = vpack.c.b16 %v1611, %v1604
    %v2046 = vpack.c.b16 %v1612, %v1605
    %v2047 = vpack.c.b16 %v1620, %v1613
    %v2048 = vpack.c.b16 %v1621, %v1614
    %v2049 = vpack.c.b16 %v1622, %v1615
    %v2050 = vpack.c.b16 %v1623, %v1616
    %v2051 = vpack.c.b16 %v1624, %v1617
    %v2052 = vpack.c.b16 %v1625, %v1618
    %v2053 = vpack.c.b16 %v1626, %v1619
    %v2054 = vpack.c.b16 %v1634, %v1627
    %v2055 = vpack.c.b16 %v1635, %v1628
    %v2056 = vpack.c.b16 %v1636, %v1629
    %v2057 = vpack.c.b16 %v1637, %v1630
    %v2058 = vpack.c.b16 %v1638, %v1631
    %v2059 = vpack.c.b16 %v1639, %v1632
    %v2060 = vpack.c.b16 %v1640, %v1633
    %v2061 = vpack.c.b16 %v1648, %v1641
    %v2062 = vpack.c.b16 %v1649, %v1642
    %v2063 = vpack.c.b16 %v1650, %v1643
    %v2064 = vpack.c.b16 %v1651, %v1644
    %v2065 = vpack.c.b16 %v1652, %v1645
    %v2066 = vpack.c.b16 %v1653, %v1646
    %v2067 = vpack.c.b16 %v1654, %v1647
    %v2068 = vpack.c.b16 %v1662, %v1655
    %v2069 = vpack.c.b16 %v1663, %v1656
    %v2070 = vpack.c.b16 %v1664, %v1657
    %v2071 = vpack.c.b16 %v1665, %v1658
    %v2072 = vpack.c.b16 %v1666, %v1659
    %v2073 = vpack.c.b16 %v1667, %v1660
    %v2074 = vpack.c.b16 %v1668, %v1661
    %v2075 = vpack.c.b16 %v1676, %v1669
    %v2076 = vpack.c.b16 %v1677, %v1670
    %v2077 = vpack.c.b16 %v1678, %v1671
    %v2078 = vpack.c.b16 %v1679, %v1672
    %v2079 = vpack.c.b16 %v1680, %v1673
    %v2080 = vpack.c.b16 %v1681, %v1674
    %v2081 = vpack.c.b16 %v1682, %v1675
    %v2082 = vpack.c.b16 %v1690, %v1683
    %v2083 = vpack.c.b16 %v1691, %v1684
    %v2084 = vpack.c.b16 %v1692, %v1685
    %v2085 = vpack.c.b16 %v1693, %v1686
    %v2086 = vpack.c.b16 %v1694, %v1687
    %v2087 = vpack.c.b16 %v1695, %v1688
    %v2088 = vpack.c.b16 %v1696, %v1689
    %v2089 = vpack.c.b16 %v1704, %v1697
    %v2090 = vpack.c.b16 %v1705, %v1698
    %v2091 = vpack.c.b16 %v1706, %v1699
    %v2092 = vpack.c.b16 %v1707, %v1700
    %v2093 = vpack.c.b16 %v1708, %v1701
    %v2094 = vpack.c.b16 %v1709, %v1702
    %v2095 = vpack.c.b16 %v1710, %v1703
    %v2096 = vpack.c.b16 %v1718, %v1711
    %v2097 = vpack.c.b16 %v1719, %v1712
    %v2098 = vpack.c.b16 %v1720, %v1713
    %v2099 = vpack.c.b16 %v1721, %v1714
    %v2100 = vpack.c.b16 %v1722, %v1715
    %v2101 = vpack.c.b16 %v1723, %v1716
    %v2102 = vpack.c.b16 %v1724, %v1717
    %v2103 = vpack.c.b16 %v1732, %v1725
    %v2104 = vpack.c.b16 %v1733, %v1726
    %v2105 = vpack.c.b16 %v1734, %v1727
    %v2106 = vpack.c.b16 %v1735, %v1728
    %v2107 = vpack.c.b16 %v1736, %v1729
    %v2108 = vpack.c.b16 %v1737, %v1730
    %v2109 = vpack.c.b16 %v1738, %v1731
    %v2110 = vpack.c.b16 %v1746, %v1739
    %v2111 = vpack.c.b16 %v1747, %v1740
    %v2112 = vpack.c.b16 %v1748, %v1741
    %v2113 = vpack.c.b16 %v1749, %v1742
    %v2114 = vpack.c.b16 %v1750, %v1743
    %v2115 = vpack.c.b16 %v1751, %v1744
    %v2116 = vpack.c.b16 %v1752, %v1745
    %v2117 = vpack.c.b16 %v1760, %v1753
    %v2118 = vpack.c.b16 %v1761, %v1754
    %v2119 = vpack.c.b16 %v1762, %v1755
    %v2120 = vpack.c.b16 %v1763, %v1756
    %v2121 = vpack.c.b16 %v1764, %v1757
    %v2122 = vpack.c.b16 %v1765, %v1758
    %v2123 = vpack.c.b16 %v1766, %v1759
    %v2124 = vpack.c.b16 %v1774, %v1767
    %v2125 = vpack.c.b16 %v1775, %v1768
    %v2126 = vpack.c.b16 %v1776, %v1769
    %v2127 = vpack.c.b16 %v1777, %v1770
    %v2128 = vpack.c.b16 %v1778, %v1771
    %v2129 = vpack.c.b16 %v1779, %v1772
    %v2130 = vpack.c.b16 %v1780, %v1773
    %v2131 = vpack.c.b16 %v1788, %v1781
    %v2132 = vpack.c.b16 %v1789, %v1782
    %v2133 = vpack.c.b16 %v1790, %v1783
    %v2134 = vpack.c.b16 %v1791, %v1784
    %v2135 = vpack.c.b16 %v1792, %v1785
    %v2136 = vpack.c.b16 %v1793, %v1786
    %v2137 = vpack.c.b16 %v1794, %v1787
    %v2138 = vpack.c.b16 %v1802, %v1795
    %v2139 = vpack.c.b16 %v1803, %v1796
    %v2140 = vpack.c.b16 %v1804, %v1797
    %v2141 = vpack.c.b16 %v1805, %v1798
    %v2142 = vpack.c.b16 %v1806, %v1799
    %v2143 = vpack.c.b16 %v1807, %v1800
    %v2144 = vpack.c.b16 %v1808, %v1801
    %v2145 = vpack.c.b16 %v1816, %v1809
    %v2146 = vpack.c.b16 %v1817, %v1810
    %v2147 = vpack.c.b16 %v1818, %v1811
    %v2148 = vpack.c.b16 %v1819, %v1812
    %v2149 = vpack.c.b16 %v1820, %v1813
    %v2150 = vpack.c.b16 %v1821, %v1814
    %v2151 = vpack.c.b16 %v1822, %v1815
    %v2152 = vpack.c.b16 %v1830, %v1823
    %v2153 = vpack.c.b16 %v1831, %v1824
    %v2154 = vpack.c.b16 %v1832, %v1825
    %v2155 = vpack.c.b16 %v1833, %v1826
    %v2156 = vpack.c.b16 %v1834, %v1827
    %v2157 = vpack.c.b16 %v1835, %v1828
    %v2158 = vpack.c.b16 %v1836, %v1829
    %v2159 = vpack.c.b16 %v1844, %v1837
    %v2160 = vpack.c.b16 %v1845, %v1838
    %v2161 = vpack.c.b16 %v1846, %v1839
    %v2162 = vpack.c.b16 %v1847, %v1840
    %v2163 = vpack.c.b16 %v1848, %v1841
    %v2164 = vpack.c.b16 %v1849, %v1842
    %v2165 = vpack.c.b16 %v1850, %v1843
    %v2166 = vpack.c.b16 %v1858, %v1851
    %v2167 = vpack.c.b16 %v1859, %v1852
    %v2168 = vpack.c.b16 %v1860, %v1853
    %v2169 = vpack.c.b16 %v1861, %v1854
    %v2170 = vpack.c.b16 %v1862, %v1855
    %v2171 = vpack.c.b16 %v1863, %v1856
    %v2172 = vpack.c.b16 %v1864, %v1857
    %v2173 = vpack.c.b16 %v1872, %v1865
    %v2174 = vpack.c.b16 %v1873, %v1866
    %v2175 = vpack.c.b16 %v1874, %v1867
    %v2176 = vpack.c.b16 %v1875, %v1868
    %v2177 = vpack.c.b16 %v1876, %v1869
    %v2178 = vpack.c.b16 %v1877, %v1870
    %v2179 = vpack.c.b16 %v1878, %v1871
    %v2180 = vpack.c.b16 %v1886, %v1879
    %v2181 = vpack.c.b16 %v1887, %v1880
    %v2182 = vpack.c.b16 %v1888, %v1881
    %v2183 = vpack.c.b16 %v1889, %v1882
    %v2184 = vpack.c.b16 %v1890, %v1883
    %v2185 = vpack.c.b16 %v1891, %v1884
    %v2186 = vpack.c.b16 %v1892, %v1885
    %v2187 = vpack.c.b16 %v1900, %v1893
    %v2188 = vpack.c.b16 %v1901, %v1894
    %v2189 = vpack.c.b16 %v1902, %v1895
    %v2190 = vpack.c.b16 %v1903, %v1896
    %v2191 = vpack.c.b16 %v1904, %v1897
    %v2192 = vpack.c.b16 %v1905, %v1898
    %v2193 = vpack.c.b16 %v1906, %v1899
    %v2194 = vpack.c.b16 %v1914, %v1907
    %v2195 = vpack.c.b16 %v1915, %v1908
    %v2196 = vpack.c.b16 %v1916, %v1909
    %v2197 = vpack.c.b16 %v1917, %v1910
    %v2198 = vpack.c.b16 %v1918, %v1911
    %v2199 = vpack.c.b16 %v1919, %v1912
    %v2200 = vpack.c.b16 %v1920, %v1913
    %v2201 = vpack.c.b16 %v1928, %v1921
    %v2202 = vpack.c.b16 %v1929, %v1922
    %v2203 = vpack.c.b16 %v1930, %v1923
    %v2204 = vpack.c.b16 %v1931, %v1924
    %v2205 = vpack.c.b16 %v1932, %v1925
    %v2206 = vpack.c.b16 %v1933, %v1926
    %v2207 = vpack.c.b16 %v1934, %v1927
    %v2208 = vpack.c.b16 %v1942, %v1935
    %v2209 = vpack.c.b16 %v1943, %v1936
    %v2210 = vpack.c.b16 %v1944, %v1937
    %v2211 = vpack.c.b16 %v1945, %v1938
    %v2212 = vpack.c.b16 %v1946, %v1939
    %v2213 = vpack.c.b16 %v1947, %v1940
    %v2214 = vpack.c.b16 %v1948, %v1941
    %v2215 = vpack.c.b16 %v1956, %v1949
    %v2216 = vpack.c.b16 %v1957, %v1950
    %v2217 = vpack.c.b16 %v1958, %v1951
    %v2218 = vpack.c.b16 %v1959, %v1952
    %v2219 = vpack.c.b16 %v1960, %v1953
    %v2220 = vpack.c.b16 %v1961, %v1954
    %v2221 = vpack.c.b16 %v1962, %v1955
    %v2222 = vpack.c.b16 %v1970, %v1963
    %v2223 = vpack.c.b16 %v1971, %v1964
    %v2224 = vpack.c.b16 %v1972, %v1965
    %v2225 = vpack.c.b16 %v1973, %v1966
    %v2226 = vpack.c.b16 %v1974, %v1967
    %v2227 = vpack.c.b16 %v1975, %v1968
    %v2228 = vpack.c.b16 %v1976, %v1969
    %v2229 = vpack.c.b16 %v1984, %v1977
    %v2230 = vpack.c.b16 %v1985, %v1978
    %v2231 = vpack.c.b16 %v1986, %v1979
    %v2232 = vpack.c.b16 %v1987, %v1980
    %v2233 = vpack.c.b16 %v1988, %v1981
    %v2234 = vpack.c.b16 %v1989, %v1982
    %v2235 = vpack.c.b16 %v1990, %v1983
    %v2236 = vpack.c.b16 %v1998, %v1991
    %v2237 = vpack.c.b16 %v1999, %v1992
    %v2238 = vpack.c.b16 %v2000, %v1993
    %v2239 = vpack.c.b16 %v2001, %v1994
    %v2240 = vpack.c.b16 %v2002, %v1995
    %v2241 = vpack.c.b16 %v2003, %v1996
    %v2242 = vpack.c.b16 %v2004, %v1997
    %v2243 = vpack.c.b16 %v2012, %v2005
    %v2244 = vpack.c.b16 %v2013, %v2006
    %v2245 = vpack.c.b16 %v2014, %v2007
    %v2246 = vpack.c.b16 %v2015, %v2008
    %v2247 = vpack.c.b16 %v2016, %v2009
    %v2248 = vpack.c.b16 %v2017, %v2010
    %v2249 = vpack.c.b16 %v2018, %v2011
    %v2250 = vpack.c.b16 %v2026, %v2019
    %v2251 = vpack.c.b16 %v2027, %v2020
    %v2252 = vpack.c.b16 %v2028, %v2021
    %v2253 = vpack.c.b16 %v2029, %v2022
    %v2254 = vpack.c.b16 %v2030, %v2023
    %v2255 = vpack.c.b16 %v2031, %v2024
    %v2256 = vpack.c.b16 %v2032, %v2025
    %2481 = vmatprep.subr.bf16.mxu0 %v2034
    %2482 = vmatpush1.bf16.msra.mxu0 %v2033
    %2483 = vmatprep.subr.bf16.mxu0 %v2041
    %2484 = vmatpush1.bf16.msra.mxu0 %v2040
    %2485 = vmatprep.subr.bf16.mxu0 %v2048
    %2486 = vmatpush1.bf16.msra.mxu0 %v2047
    %2487 = vmatprep.subr.bf16.mxu0 %v2055
    %2488 = vmatpush1.bf16.msra.mxu0 %v2054
    %2489 = vmatprep.subr.bf16.mxu0 %v2062
    %2490 = vmatpush1.bf16.msra.mxu0 %v2061
    %2491 = vmatprep.subr.bf16.mxu0 %v2069
    %2492 = vmatpush1.bf16.msra.mxu0 %v2068
    %2493 = vmatprep.subr.bf16.mxu0 %v2076
    %2494 = vmatpush1.bf16.msra.mxu0 %v2075
    %2495 = vmatprep.subr.bf16.mxu0 %v2083
    %2496 = vmatpush1.bf16.msra.mxu0 %v2082
    %2497 = vmatprep.subr.bf16.mxu0 %v2090
    %2498 = vmatpush1.bf16.msra.mxu0 %v2089
    %2499 = vmatprep.subr.bf16.mxu0 %v2097
    %2500 = vmatpush1.bf16.msra.mxu0 %v2096
    %2501 = vmatprep.subr.bf16.mxu0 %v2104
    %2502 = vmatpush1.bf16.msra.mxu0 %v2103
    %2503 = vmatprep.subr.bf16.mxu0 %v2111
    %2504 = vmatpush1.bf16.msra.mxu0 %v2110
    %2505 = vmatprep.subr.bf16.mxu0 %v2118
    %2506 = vmatpush1.bf16.msra.mxu0 %v2117
    %2507 = vmatprep.subr.bf16.mxu0 %v2125
    %2508 = vmatpush1.bf16.msra.mxu0 %v2124
    %2509 = vmatprep.subr.bf16.mxu0 %v2132
    %2510 = vmatpush1.bf16.msra.mxu0 %v2131
    %2511 = vmatprep.subr.bf16.mxu0 %v2139
    %2512 = vmatpush1.bf16.msra.mxu0 %v2138
    %2513 = vmatprep.mubr.bf16.mxu0 %v1290
    %2514 = vmatmul.mubr.bf16.gmra.mrb[0].mxu0 %v1289
    %v2515 = vpop.f32.mrb[0].mxu0
    %v2516 = vadd.f32 %v1297, %v2515
    %v2517 = vpop.f32.mrb[0].mxu0
    %v2518 = vadd.f32 %v1301, %v2517
    %v2519 = vpop.f32.mrb[0].mxu0
    %v2520 = vpop.f32.mrb[0].mxu0
    %2521 = vdwg.mxu0
    %2522 = vmatprep.subr.bf16.mxu0 %v2146
    %2523 = vmatpush1.bf16.msra.mxu0 %v2145
    %2524 = vmatprep.subr.bf16.mxu0 %v2153
    %2525 = vmatpush1.bf16.msra.mxu0 %v2152
    %2526 = vmatprep.subr.bf16.mxu0 %v2160
    %2527 = vmatpush1.bf16.msra.mxu0 %v2159
    %2528 = vmatprep.subr.bf16.mxu0 %v2167
    %2529 = vmatpush1.bf16.msra.mxu0 %v2166
    %2530 = vmatprep.subr.bf16.mxu0 %v2174
    %2531 = vmatpush1.bf16.msra.mxu0 %v2173
    %2532 = vmatprep.subr.bf16.mxu0 %v2181
    %2533 = vmatpush1.bf16.msra.mxu0 %v2180
    %2534 = vmatprep.subr.bf16.mxu0 %v2188
    %2535 = vmatpush1.bf16.msra.mxu0 %v2187
    %2536 = vmatprep.subr.bf16.mxu0 %v2195
    %2537 = vmatpush1.bf16.msra.mxu0 %v2194
    %2538 = vmatprep.subr.bf16.mxu0 %v2202
    %2539 = vmatpush1.bf16.msra.mxu0 %v2201
    %2540 = vmatprep.subr.bf16.mxu0 %v2209
    %2541 = vmatpush1.bf16.msra.mxu0 %v2208
    %2542 = vmatprep.subr.bf16.mxu0 %v2216
    %2543 = vmatpush1.bf16.msra.mxu0 %v2215
    %2544 = vmatprep.subr.bf16.mxu0 %v2223
    %2545 = vmatpush1.bf16.msra.mxu0 %v2222
    %2546 = vmatprep.subr.bf16.mxu0 %v2230
    %2547 = vmatpush1.bf16.msra.mxu0 %v2229
    %2548 = vmatprep.subr.bf16.mxu0 %v2237
    %2549 = vmatpush1.bf16.msra.mxu0 %v2236
    %2550 = vmatprep.subr.bf16.mxu0 %v2244
    %2551 = vmatpush1.bf16.msra.mxu0 %v2243
    %2552 = vmatprep.subr.bf16.mxu0 %v2251
    %2553 = vmatpush1.bf16.msra.mxu0 %v2250
    %2554 = vmatprep.mubr.bf16.mxu0 %v1292
    %2555 = vmatmul.mubr.bf16.gmra.mrb[0].mxu0 %v1291
    %v2556 = vpop.f32.mrb[0].mxu0
    %v2557 = vadd.f32 %v2516, %v2556
    %v2558 = vpop.f32.mrb[0].mxu0
    %v2559 = vadd.f32 %v2518, %v2558
    %v2560 = vpop.f32.mrb[0].mxu0
    %v2561 = vpop.f32.mrb[0].mxu0
    %2562 = vdwg.mxu0
    %2563 = vmatprep.subr.bf16.mxu0 %v2036
    %2564 = vmatpush1.bf16.msra.mxu0 %v2035
    %2565 = vmatprep.subr.bf16.mxu0 %v2043
    %2566 = vmatpush1.bf16.msra.mxu0 %v2042
    %2567 = vmatprep.subr.bf16.mxu0 %v2050
    %2568 = vmatpush1.bf16.msra.mxu0 %v2049
    %2569 = vmatprep.subr.bf16.mxu0 %v2057
    %2570 = vmatpush1.bf16.msra.mxu0 %v2056
    %2571 = vmatprep.subr.bf16.mxu0 %v2064
    %2572 = vmatpush1.bf16.msra.mxu0 %v2063
    %2573 = vmatprep.subr.bf16.mxu0 %v2071
    %2574 = vmatpush1.bf16.msra.mxu0 %v2070
    %2575 = vmatprep.subr.bf16.mxu0 %v2078
    %2576 = vmatpush1.bf16.msra.mxu0 %v2077
    %2577 = vmatprep.subr.bf16.mxu0 %v2085
    %2578 = vmatpush1.bf16.msra.mxu0 %v2084
    %2579 = vmatprep.subr.bf16.mxu0 %v2092
    %2580 = vmatpush1.bf16.msra.mxu0 %v2091
    %2581 = vmatprep.subr.bf16.mxu0 %v2099
    %2582 = vmatpush1.bf16.msra.mxu0 %v2098
    %2583 = vmatprep.subr.bf16.mxu0 %v2106
    %2584 = vmatpush1.bf16.msra.mxu0 %v2105
    %2585 = vmatprep.subr.bf16.mxu0 %v2113
    %2586 = vmatpush1.bf16.msra.mxu0 %v2112
    %2587 = vmatprep.subr.bf16.mxu0 %v2120
    %2588 = vmatpush1.bf16.msra.mxu0 %v2119
    %2589 = vmatprep.subr.bf16.mxu0 %v2127
    %2590 = vmatpush1.bf16.msra.mxu0 %v2126
    %2591 = vmatprep.subr.bf16.mxu0 %v2134
    %2592 = vmatpush1.bf16.msra.mxu0 %v2133
    %2593 = vmatprep.subr.bf16.mxu0 %v2141
    %2594 = vmatpush1.bf16.msra.mxu0 %v2140
    %2595 = vmatprep.mubr.bf16.mxu0 %v1290
    %2596 = vmatmul.mubr.bf16.gmra.mrb[0].mxu0 %v1289
    %v2597 = vpop.f32.mrb[0].mxu0
    %v2598 = vadd.f32 %v1305, %v2597
    %v2599 = vpop.f32.mrb[0].mxu0
    %v2600 = vadd.f32 %v1309, %v2599
    %v2601 = vpop.f32.mrb[0].mxu0
    %v2602 = vpop.f32.mrb[0].mxu0
    %2603 = vdwg.mxu0
    %2604 = vmatprep.subr.bf16.mxu0 %v2148
    %2605 = vmatpush1.bf16.msra.mxu0 %v2147
    %2606 = vmatprep.subr.bf16.mxu0 %v2155
    %2607 = vmatpush1.bf16.msra.mxu0 %v2154
    %2608 = vmatprep.subr.bf16.mxu0 %v2162
    %2609 = vmatpush1.bf16.msra.mxu0 %v2161
    %2610 = vmatprep.subr.bf16.mxu0 %v2169
    %2611 = vmatpush1.bf16.msra.mxu0 %v2168
    %2612 = vmatprep.subr.bf16.mxu0 %v2176
    %2613 = vmatpush1.bf16.msra.mxu0 %v2175
    %2614 = vmatprep.subr.bf16.mxu0 %v2183
    %2615 = vmatpush1.bf16.msra.mxu0 %v2182
    %2616 = vmatprep.subr.bf16.mxu0 %v2190
    %2617 = vmatpush1.bf16.msra.mxu0 %v2189
    %2618 = vmatprep.subr.bf16.mxu0 %v2197
    %2619 = vmatpush1.bf16.msra.mxu0 %v2196
    %2620 = vmatprep.subr.bf16.mxu0 %v2204
    %2621 = vmatpush1.bf16.msra.mxu0 %v2203
    %2622 = vmatprep.subr.bf16.mxu0 %v2211
    %2623 = vmatpush1.bf16.msra.mxu0 %v2210
    %2624 = vmatprep.subr.bf16.mxu0 %v2218
    %2625 = vmatpush1.bf16.msra.mxu0 %v2217
    %2626 = vmatprep.subr.bf16.mxu0 %v2225
    %2627 = vmatpush1.bf16.msra.mxu0 %v2224
    %2628 = vmatprep.subr.bf16.mxu0 %v2232
    %2629 = vmatpush1.bf16.msra.mxu0 %v2231
    %2630 = vmatprep.subr.bf16.mxu0 %v2239
    %2631 = vmatpush1.bf16.msra.mxu0 %v2238
    %2632 = vmatprep.subr.bf16.mxu0 %v2246
    %2633 = vmatpush1.bf16.msra.mxu0 %v2245
    %2634 = vmatprep.subr.bf16.mxu0 %v2253
    %2635 = vmatpush1.bf16.msra.mxu0 %v2252
    %2636 = vmatprep.mubr.bf16.mxu0 %v1292
    %2637 = vmatmul.mubr.bf16.gmra.mrb[0].mxu0 %v1291
    %v2638 = vpop.f32.mrb[0].mxu0
    %v2639 = vadd.f32 %v2598, %v2638
    %v2640 = vpop.f32.mrb[0].mxu0
    %v2641 = vadd.f32 %v2600, %v2640
    %v2642 = vpop.f32.mrb[0].mxu0
    %v2643 = vpop.f32.mrb[0].mxu0
    %2644 = vdwg.mxu0
    %2645 = vmatprep.subr.bf16.mxu0 %v2038
    %2646 = vmatpush1.bf16.msra.mxu0 %v2037
    %2647 = vmatprep.subr.bf16.mxu0 %v2045
    %2648 = vmatpush1.bf16.msra.mxu0 %v2044
    %2649 = vmatprep.subr.bf16.mxu0 %v2052
    %2650 = vmatpush1.bf16.msra.mxu0 %v2051
    %2651 = vmatprep.subr.bf16.mxu0 %v2059
    %2652 = vmatpush1.bf16.msra.mxu0 %v2058
    %2653 = vmatprep.subr.bf16.mxu0 %v2066
    %2654 = vmatpush1.bf16.msra.mxu0 %v2065
    %2655 = vmatprep.subr.bf16.mxu0 %v2073
    %2656 = vmatpush1.bf16.msra.mxu0 %v2072
    %2657 = vmatprep.subr.bf16.mxu0 %v2080
    %2658 = vmatpush1.bf16.msra.mxu0 %v2079
    %2659 = vmatprep.subr.bf16.mxu0 %v2087
    %2660 = vmatpush1.bf16.msra.mxu0 %v2086
    %2661 = vmatprep.subr.bf16.mxu0 %v2094
    %2662 = vmatpush1.bf16.msra.mxu0 %v2093
    %2663 = vmatprep.subr.bf16.mxu0 %v2101
    %2664 = vmatpush1.bf16.msra.mxu0 %v2100
    %2665 = vmatprep.subr.bf16.mxu0 %v2108
    %2666 = vmatpush1.bf16.msra.mxu0 %v2107
    %2667 = vmatprep.subr.bf16.mxu0 %v2115
    %2668 = vmatpush1.bf16.msra.mxu0 %v2114
    %2669 = vmatprep.subr.bf16.mxu0 %v2122
    %2670 = vmatpush1.bf16.msra.mxu0 %v2121
    %2671 = vmatprep.subr.bf16.mxu0 %v2129
    %2672 = vmatpush1.bf16.msra.mxu0 %v2128
    %2673 = vmatprep.subr.bf16.mxu0 %v2136
    %2674 = vmatpush1.bf16.msra.mxu0 %v2135
    %2675 = vmatprep.subr.bf16.mxu0 %v2143
    %2676 = vmatpush1.bf16.msra.mxu0 %v2142
    %2677 = vmatprep.mubr.bf16.mxu0 %v1290
    %2678 = vmatmul.mubr.bf16.gmra.mrb[0].mxu0 %v1289
    %v2679 = vpop.f32.mrb[0].mxu0
    %v2680 = vadd.f32 %v1313, %v2679
    %v2681 = vpop.f32.mrb[0].mxu0
    %v2682 = vadd.f32 %v1317, %v2681
    %v2683 = vpop.f32.mrb[0].mxu0
    %v2684 = vpop.f32.mrb[0].mxu0
    %2685 = vdwg.mxu0
    %2686 = vmatprep.subr.bf16.mxu0 %v2150
    %2687 = vmatpush1.bf16.msra.mxu0 %v2149
    %2688 = vmatprep.subr.bf16.mxu0 %v2157
    %2689 = vmatpush1.bf16.msra.mxu0 %v2156
    %2690 = vmatprep.subr.bf16.mxu0 %v2164
    %2691 = vmatpush1.bf16.msra.mxu0 %v2163
    %2692 = vmatprep.subr.bf16.mxu0 %v2171
    %2693 = vmatpush1.bf16.msra.mxu0 %v2170
    %2694 = vmatprep.subr.bf16.mxu0 %v2178
    %2695 = vmatpush1.bf16.msra.mxu0 %v2177
    %2696 = vmatprep.subr.bf16.mxu0 %v2185
    %2697 = vmatpush1.bf16.msra.mxu0 %v2184
    %2698 = vmatprep.subr.bf16.mxu0 %v2192
    %2699 = vmatpush1.bf16.msra.mxu0 %v2191
    %2700 = vmatprep.subr.bf16.mxu0 %v2199
    %2701 = vmatpush1.bf16.msra.mxu0 %v2198
    %2702 = vmatprep.subr.bf16.mxu0 %v2206
    %2703 = vmatpush1.bf16.msra.mxu0 %v2205
    %2704 = vmatprep.subr.bf16.mxu0 %v2213
    %2705 = vmatpush1.bf16.msra.mxu0 %v2212
    %2706 = vmatprep.subr.bf16.mxu0 %v2220
    %2707 = vmatpush1.bf16.msra.mxu0 %v2219
    %2708 = vmatprep.subr.bf16.mxu0 %v2227
    %2709 = vmatpush1.bf16.msra.mxu0 %v2226
    %2710 = vmatprep.subr.bf16.mxu0 %v2234
    %2711 = vmatpush1.bf16.msra.mxu0 %v2233
    %2712 = vmatprep.subr.bf16.mxu0 %v2241
    %2713 = vmatpush1.bf16.msra.mxu0 %v2240
    %2714 = vmatprep.subr.bf16.mxu0 %v2248
    %2715 = vmatpush1.bf16.msra.mxu0 %v2247
    %2716 = vmatprep.subr.bf16.mxu0 %v2255
    %2717 = vmatpush1.bf16.msra.mxu0 %v2254
    %2718 = vmatprep.mubr.bf16.mxu0 %v1292
    %2719 = vmatmul.mubr.bf16.gmra.mrb[0].mxu0 %v1291
    %v2720 = vpop.f32.mrb[0].mxu0
    %v2721 = vadd.f32 %v2680, %v2720
    %v2722 = vpop.f32.mrb[0].mxu0
    %v2723 = vadd.f32 %v2682, %v2722
    %v2724 = vpop.f32.mrb[0].mxu0
    %v2725 = vpop.f32.mrb[0].mxu0
    %2726 = vdwg.mxu0
    %2727 = vmatprep.subr.bf16.mxu0 0
    %2728 = vmatpush1.bf16.msra.mxu0 %v2039
    %2729 = vmatprep.subr.bf16.mxu0 0
    %2730 = vmatpush1.bf16.msra.mxu0 %v2046
    %2731 = vmatprep.subr.bf16.mxu0 0
    %2732 = vmatpush1.bf16.msra.mxu0 %v2053
    %2733 = vmatprep.subr.bf16.mxu0 0
    %2734 = vmatpush1.bf16.msra.mxu0 %v2060
    %2735 = vmatprep.subr.bf16.mxu0 0
    %2736 = vmatpush1.bf16.msra.mxu0 %v2067
    %2737 = vmatprep.subr.bf16.mxu0 0
    %2738 = vmatpush1.bf16.msra.mxu0 %v2074
    %2739 = vmatprep.subr.bf16.mxu0 0
    %2740 = vmatpush1.bf16.msra.mxu0 %v2081
    %2741 = vmatprep.subr.bf16.mxu0 0
    %2742 = vmatpush1.bf16.msra.mxu0 %v2088
    %2743 = vmatprep.subr.bf16.mxu0 0
    %2744 = vmatpush1.bf16.msra.mxu0 %v2095
    %2745 = vmatprep.subr.bf16.mxu0 0
    %2746 = vmatpush1.bf16.msra.mxu0 %v2102
    %2747 = vmatprep.subr.bf16.mxu0 0
    %2748 = vmatpush1.bf16.msra.mxu0 %v2109
    %2749 = vmatprep.subr.bf16.mxu0 0
    %2750 = vmatpush1.bf16.msra.mxu0 %v2116
    %2751 = vmatprep.subr.bf16.mxu0 0
    %2752 = vmatpush1.bf16.msra.mxu0 %v2123
    %2753 = vmatprep.subr.bf16.mxu0 0
    %2754 = vmatpush1.bf16.msra.mxu0 %v2130
    %2755 = vmatprep.subr.bf16.mxu0 0
    %2756 = vmatpush1.bf16.msra.mxu0 %v2137
    %2757 = vmatprep.subr.bf16.mxu0 0
    %2758 = vmatpush1.bf16.msra.mxu0 %v2144
    %2759 = vmatprep.mubr.bf16.mxu0 %v1290
    %2760 = vmatmul.mubr.bf16.gmra.mrb[0].mxu0 %v1289
    %v2761 = vpop.f32.mrb[0].mxu0
    %v2762 = vadd.f32 %v1321, %v2761
    %v2763 = vpop.f32.mrb[0].mxu0
    %v2764 = vpop.f32.mrb[0].mxu0
    %v2765 = vpop.f32.mrb[0].mxu0
    %2766 = vdwg.mxu0
    %2767 = vmatprep.subr.bf16.mxu0 0
    %2768 = vmatpush1.bf16.msra.mxu0 %v2151
    %2769 = vmatprep.subr.bf16.mxu0 0
    %2770 = vmatpush1.bf16.msra.mxu0 %v2158
    %2771 = vmatprep.subr.bf16.mxu0 0
    %2772 = vmatpush1.bf16.msra.mxu0 %v2165
    %2773 = vmatprep.subr.bf16.mxu0 0
    %2774 = vmatpush1.bf16.msra.mxu0 %v2172
    %2775 = vmatprep.subr.bf16.mxu0 0
    %2776 = vmatpush1.bf16.msra.mxu0 %v2179
    %2777 = vmatprep.subr.bf16.mxu0 0
    %2778 = vmatpush1.bf16.msra.mxu0 %v2186
    %2779 = vmatprep.subr.bf16.mxu0 0
    %2780 = vmatpush1.bf16.msra.mxu0 %v2193
    %2781 = vmatprep.subr.bf16.mxu0 0
    %2782 = vmatpush1.bf16.msra.mxu0 %v2200
    %2783 = vmatprep.subr.bf16.mxu0 0
    %2784 = vmatpush1.bf16.msra.mxu0 %v2207
    %2785 = vmatprep.subr.bf16.mxu0 0
    %2786 = vmatpush1.bf16.msra.mxu0 %v2214
    %2787 = vmatprep.subr.bf16.mxu0 0
    %2788 = vmatpush1.bf16.msra.mxu0 %v2221
    %2789 = vmatprep.subr.bf16.mxu0 0
    %2790 = vmatpush1.bf16.msra.mxu0 %v2228
    %2791 = vmatprep.subr.bf16.mxu0 0
    %2792 = vmatpush1.bf16.msra.mxu0 %v2235
    %2793 = vmatprep.subr.bf16.mxu0 0
    %2794 = vmatpush1.bf16.msra.mxu0 %v2242
    %2795 = vmatprep.subr.bf16.mxu0 0
    %2796 = vmatpush1.bf16.msra.mxu0 %v2249
    %2797 = vmatprep.subr.bf16.mxu0 0
    %2798 = vmatpush1.bf16.msra.mxu0 %v2256
    %2799 = vmatprep.mubr.bf16.mxu0 %v1292
    %2800 = vmatmul.mubr.bf16.gmra.mrb[0].mxu0 %v1291
    %v2801 = vpop.f32.mrb[0].mxu0
    %v2802 = vadd.f32 %v2762, %v2801
    %v2803 = vpop.f32.mrb[0].mxu0
    %v2804 = vpop.f32.mrb[0].mxu0
    %v2805 = vpop.f32.mrb[0].mxu0
    %2806 = vdwg.mxu0
    %v2807 = vmul.f32 %v2557, 0.5
    %v2808 = vmul.f32 %v2559, 0.5
    %v2809 = vmul.f32 %v2639, 0.5
    %v2810 = vmul.f32 %v2641, 0.5
    %v2811 = vmul.f32 %v2721, 0.5
    %v2812 = vmul.f32 %v2723, 0.5
    %v2813 = vmul.f32 %v2802, 0.5
    %v2814 = vtanh.pop %v2807
    %v2815 = vtanh.pop %v2808
    %v2816 = vtanh.pop %v2809
    %v2817 = vtanh.pop %v2810
    %v2818 = vtanh.pop %v2811
    %v2819 = vtanh.pop %v2812
    %v2820 = vtanh.pop %v2813
    %v2821 = vadd.f32 %v2814, 1.0
    %v2822 = vadd.f32 %v2815, 1.0
    %v2823 = vadd.f32 %v2816, 1.0
    %v2824 = vadd.f32 %v2817, 1.0
    %v2825 = vadd.f32 %v2818, 1.0
    %v2826 = vadd.f32 %v2819, 1.0
    %v2827 = vadd.f32 %v2820, 1.0
    %v2828 = vmul.f32 %v2821, 0.5
    %v2829 = vmul.f32 %v2822, 0.5
    %v2830 = vmul.f32 %v2823, 0.5
    %v2831 = vmul.f32 %v2824, 0.5
    %v2832 = vmul.f32 %v2825, 0.5
    %v2833 = vmul.f32 %v2826, 0.5
    %v2834 = vmul.f32 %v2827, 0.5
    %2835 = vst [vmem:[#allocation2] sm:$0xff] %v2828
    %2836 = vst [vmem:[#allocation2 + $0x8] sm:$0xff] %v2829
    %2837 = vst [vmem:[#allocation2 + $0x10] sm:$0xff] %v2830
    %2838 = vst [vmem:[#allocation2 + $0x18] sm:$0xff] %v2831
    %2839 = vst [vmem:[#allocation2 + $0x20] sm:$0xff] %v2832
    %2840 = vst [vmem:[#allocation2 + $0x28] sm:$0xff] %v2833
    %vm2841 = vcmask 130048
    %2842 = vst.msk [vmem:[#allocation2 + $0x30] sm:$0xff] %vm2841, %v2834
    // Predicated region
    $region54: #{tpu_custom_call.1} parent=1 // pred_check
      _
    $region55: #{tpu_custom_call.1} parent=1 // pred_check_branch
      %2844 = sbr.rel (0) target = $region57
    $region56: #{tpu_custom_call.1} parent=1 // pred_region
      %s2846 = ssub.s32 896, 896
      %2847 = vsyncadd [#allocation3], %s2846
      %s2849 = sshll.u32 [#allocation2], 4
      %s2850 = int_to_ptr.vmem [resolvable:$true] %s2849
      %2852 = dma.vmem_to_hbm [thread:$0]  %s2850, 896, %s13, [#allocation3]
    $region57: #{tpu_custom_call.1} parent=1 // pred_fallthru
      _
    // Predicated region
    $region58: #{tpu_custom_call.1} parent=1 // pred_check
      _
    $region59: #{tpu_custom_call.1} parent=1 // pred_check_branch
      %2854 = sbr.rel (0) target = $region61
    $region60: #{tpu_custom_call.1} parent=1 // pred_region
      %2855 = dma.done [#allocation3], 896
    $region61: #{tpu_custom_call.1} parent=1 // pred_fallthru
      _
    %2856 = vsyncpa [#allocation3], 1

</llo_original>
